<compile_context>
chip_gen: v6e
topology: v6e:2x2x1
jax: 0.10.0
libtpu: 0.0.40
codegen_flags: <defaults>
</compile_context>

<pallas_src>
import jax
import jax.numpy as jnp
import numpy as np
from jax.experimental import pallas as pl
from jax.experimental.pallas import tpu as pltpu


def _vmem_spec():
    # whole-array block resident in VMEM (shapes here are tiny, no grid tiling)
    return pl.BlockSpec(memory_space=pltpu.MemorySpace.VMEM)


def _smem_spec():
    return pl.BlockSpec(memory_space=pltpu.MemorySpace.SMEM)


# --------------------------------------------------------------------------
# Shared in-kernel body: one-hot token gather + RNN + masked attention
# pooling + fc/tanh.  Everything stays in vregs; no VMEM scratch.
#   ids      : (B, T)    int32 token ids (batch-major, exactly as passed in)
#   len_b1   : (B, 1)    int32 valid lengths
#   xw_table : (Vpad, H) f32   = embed @ W_ih + b_h   (folded offline)
#   whh (H,H)  v_row (1,H)  wfc (H,P)  bfc (1,P)
# Returns enc (B, P) and lane-major attention (B, T).
# --------------------------------------------------------------------------
def _encoder_fc_body(ids, len_b1, xw_table, whh, v_row, wfc, bfc):
    B, T = ids.shape
    Vp, H = xw_table.shape

    # Hoisted iotas (JAX does not CSE broadcast_in_dim -- build once, reuse).
    vocab_iota = jax.lax.broadcasted_iota(jnp.int32, (B, Vp), 1)
    lane_t = jax.lax.broadcasted_iota(jnp.int32, (B, T), 1)

    hs = []
    scores_bt = jnp.zeros((B, T), jnp.float32)
    h = None
    for t in range(T):
        # In-kernel embedding + input-projection gather: one-hot row select of
        # the pre-folded table on the MXU (overlaps the serial h @ W_hh chain).
        onehot = (ids[:, t:t + 1] == vocab_iota).astype(jnp.float32)       # (B, Vp)
        xw_t = jnp.dot(onehot, xw_table,
                       preferred_element_type=jnp.float32)                 # (B, H)
        if t == 0:
            h = jnp.tanh(xw_t)                      # h0 == 0  =>  h0 @ W_hh == 0
        else:
            h = jnp.tanh(xw_t + jnp.dot(h, whh,
                                        preferred_element_type=jnp.float32))
        hs.append(h)
        # Per-step attention score computed immediately (hidden states stay in
        # vregs; the cross-lane reduce uses the otherwise-idle XLU slot).
        s_t = jnp.sum(h * v_row, axis=1, keepdims=True)                    # (B, 1)
        scores_bt = scores_bt + jnp.where(lane_t == t, s_t, 0.0)

    mask = lane_t < len_b1                                                 # (B, T)
    scores_bt = jnp.where(mask, scores_bt, -1e30)
    m = jnp.max(scores_bt, axis=1, keepdims=True)
    e = jnp.where(mask, jnp.exp(scores_bt - m), 0.0)
    # NOTE: rows with inputs_len == 0 would give a 0 denominator (same as the
    # PyTorch reference); callers use lens >= 1.
    att = e * pl.reciprocal(jnp.sum(e, axis=1, keepdims=True), approx=True)  # (B, T)

    # Attention-weighted sum from the live hidden states (no (T,B,H) reload).
    enc_raw = att[:, 0:1] * hs[0]
    for t in range(1, T):
        enc_raw = enc_raw + att[:, t:t + 1] * hs[t]                        # (B, H)

    enc = jnp.tanh(jnp.dot(enc_raw, wfc, preferred_element_type=jnp.float32)
                   + bfc)                                                  # (B, P)
    return enc, att


# --------------------------------------------------------------------------
# Shared in-kernel body: softmax(-squared_euclidean(x, p)) via Gram matrix.
#   x : (N, D)   p : (C, D)   ->  (N, C)
# --------------------------------------------------------------------------
def _neg_dist_softmax(x, p):
    dn = (((1,), (1,)), ((), ()))                                          # contract last dims
    xp = jax.lax.dot_general(x, p, dn,
                             preferred_element_type=jnp.float32)           # (N, C)
    xsq = jnp.sum(x * x, axis=1, keepdims=True)                            # (N, 1)
    ones = jnp.ones((1, x.shape[1]), jnp.float32)
    psq = jax.lax.dot_general(ones, p * p, dn,
                              preferred_element_type=jnp.float32)          # (1, C)
    logits = 2.0 * xp - xsq - psq                                          # = -dist
    m = jnp.max(logits, axis=1, keepdims=True)
    e = jnp.exp(logits - m)
    return e * pl.reciprocal(jnp.sum(e, axis=1, keepdims=True), approx=True)


# --------------------------------------------------------------------------
# Fused TRAINING kernel:
#   token gather + encoder + fc/tanh + prototype EMA + query dists + softmax.
#   sup_mat : (C, B)    support-averaging one-hot matrix (rows sum supports/S)
#   qry_mat : (C*Q, B)  query-gathering one-hot matrix
# --------------------------------------------------------------------------
def proto_train_kernel(alpha_ref, ids_ref, len_ref, xw_ref, whh_ref, v_ref,
                       wfc_ref, bfc_ref, sup_ref, qry_ref, old_ref,
                       prob_ref, newp_ref, enc_ref, att_ref):
    enc, att = _encoder_fc_body(ids_ref[...], len_ref[...], xw_ref[...],
                                whh_ref[...], v_ref[...], wfc_ref[...],
                                bfc_ref[...])
    enc_ref[...] = enc
    att_ref[...] = att                                                     # lane-major (B, T)

    alpha = alpha_ref[0, 0]                                                # SMEM scalar
    proto_mean = jnp.dot(sup_ref[...], enc,
                         preferred_element_type=jnp.float32)               # (C, P)
    new_p = alpha * old_ref[...] + (1.0 - alpha) * proto_mean
    newp_ref[...] = new_p                                                  # aliased with old_ref's HBM buffer

    q = jnp.dot(qry_ref[...], enc, preferred_element_type=jnp.float32)     # (C*Q, P)
    prob_ref[...] = _neg_dist_softmax(q, new_p)


# --------------------------------------------------------------------------
# Fused EVAL kernel: token gather + encoder + fc/tanh + distances to protos.
# --------------------------------------------------------------------------
def proto_eval_kernel(ids_ref, len_ref, xw_ref, whh_ref, v_ref, wfc_ref,
                      bfc_ref, protos_ref, prob_ref, enc_ref, att_ref):
    enc, att = _encoder_fc_body(ids_ref[...], len_ref[...], xw_ref[...],
                                whh_ref[...], v_ref[...], wfc_ref[...],
                                bfc_ref[...])
    enc_ref[...] = enc
    att_ref[...] = att
    prob_ref[...] = _neg_dist_softmax(enc, protos_ref[...])


# --------------------------------------------------------------------------
# Wrapper
# --------------------------------------------------------------------------
class ProtoNetPallas:
    def __init__(self, key, *, class_num, proto_dim, support_num,
                 samples_per_class, vocab_size, embed_dim, hidden_dim):
        self.class_num = class_num
        self.proto_dim = proto_dim
        self.support_num = support_num
        self.samples_per_class = samples_per_class
        self.query_num = samples_per_class - support_num
        self.hidden_dim = hidden_dim

        k = jax.random.split(key, 6)
        s = 0.1
        self.embed = jax.random.normal(k[0], (vocab_size, embed_dim), jnp.float32) * s
        self.w_ih = jax.random.normal(k[1], (embed_dim, hidden_dim), jnp.float32) * s
        self.w_hh = jax.random.normal(k[2], (hidden_dim, hidden_dim), jnp.float32) * s
        self.b_h = jnp.zeros((1, hidden_dim), jnp.float32)
        self.v_att = jax.random.normal(k[3], (1, hidden_dim), jnp.float32) * s
        self.w_fc = jax.random.normal(k[4], (hidden_dim, proto_dim), jnp.float32) * s
        self.b_fc = jax.random.normal(k[5], (1, proto_dim), jnp.float32) * s
        # matches nn.Parameter(torch.zeros([class_num, proto_dim]), requires_grad=False)
        self.prototypes = jnp.zeros((class_num, proto_dim), jnp.float32)

        # Input projection folded offline (valid: weights are static between
        # forwards; recompute xw_table if embed / w_ih / b_h ever change):
        #   xw_table[v] = embed[v] @ W_ih + b_h
        # Vocab padded to a lane-friendly multiple of 128; pad rows are never
        # selected because ids < vocab_size.
        vpad = ((vocab_size + 127) // 128) * 128
        xw = jnp.dot(self.embed, self.w_ih,
                     precision=jax.lax.Precision.HIGHEST) + self.b_h
        self.xw_table = jnp.zeros((vpad, hidden_dim), jnp.float32).at[:vocab_size].set(xw)

        # Static one-hot matrices: support-mean and query-gather as MXU matmuls
        # (avoids in-kernel reshapes of the (B, P) encodings). 1/support_num is
        # baked in so the kernel does no division for the prototype mean.
        B_tr = class_num * samples_per_class
        sup = np.zeros((class_num, B_tr), np.float32)
        qry = np.zeros((class_num * self.query_num, B_tr), np.float32)
        for c in range(class_num):
            base = c * samples_per_class
            sup[c, base:base + support_num] = 1.0 / support_num
            for j in range(self.query_num):
                qry[c * self.query_num + j, base + support_num + j] = 1.0
        self.sup_mat = jnp.asarray(sup)
        self.qry_mat = jnp.asarray(qry)

    # ---- forward --------------------------------------------------------
    def forward(self, inputs, inputs_len, alpha=None, training=False):
        B, T = inputs.shape
        P, C = self.proto_dim, self.class_num

        ids = inputs.astype(jnp.int32)                        # (B, T), consumed as-is
        len_b1 = inputs_len.reshape(B, 1).astype(jnp.int32)   # (B, 1)

        common = (ids, len_b1, self.xw_table, self.w_hh, self.v_att,
                  self.w_fc, self.b_fc)
        vm = _vmem_spec()

        if training:
            assert B == self.class_num * (self.support_num + self.query_num)
            Nq = C * self.query_num
            cls_prob, new_protos, enc, att = pl.pallas_call(
                proto_train_kernel,
                out_shape=(jax.ShapeDtypeStruct((Nq, C), jnp.float32),
                           jax.ShapeDtypeStruct((C, P), jnp.float32),
                           jax.ShapeDtypeStruct((B, P), jnp.float32),
                           jax.ShapeDtypeStruct((B, T), jnp.float32)),
                in_specs=[_smem_spec()] + [vm] * 10,
                out_specs=(vm, vm, vm, vm),
                # Prototype EMA in place: old prototypes (input 10) alias the
                # new prototypes (output 1).  XLA copies defensively if the
                # input buffer is not donated, so this is always correct.
                input_output_aliases={10: 1},
            )(jnp.full((1, 1), alpha, jnp.float32), *common,
              self.sup_mat, self.qry_mat, self.prototypes)
            self.prototypes = new_protos
            return cls_prob, self.prototypes, enc, att

        cls_prob, enc, att = pl.pallas_call(
            proto_eval_kernel,
            out_shape=(jax.ShapeDtypeStruct((B, C), jnp.float32),
                       jax.ShapeDtypeStruct((B, P), jnp.float32),
                       jax.ShapeDtypeStruct((B, T), jnp.float32)),
            in_specs=[vm] * 8,
            out_specs=(vm, vm, vm),
        )(*common, self.prototypes)
        return cls_prob, self.prototypes, enc, att


# --------------------------------------------------------------------------
# pure-JAX reference (for correctness check only)
# --------------------------------------------------------------------------
def reference_forward(model, inputs, inputs_len, prototypes, alpha=None,
                      training=False):
    hp = jax.lax.Precision.HIGHEST
    B, T = inputs.shape
    x = jnp.take(model.embed, inputs, axis=0)                   # (B, T, E)

    def step(h, xt):
        h_new = jnp.tanh(jnp.dot(xt, model.w_ih, precision=hp)
                         + jnp.dot(h, model.w_hh, precision=hp) + model.b_h)
        return h_new, h_new

    h0 = jnp.zeros((B, model.hidden_dim), jnp.float32)
    _, hs = jax.lax.scan(step, h0, jnp.transpose(x, (1, 0, 2)))
    hs = jnp.transpose(hs, (1, 0, 2))                           # (B, T, H)
    scores = jnp.sum(hs * model.v_att.reshape(1, 1, -1), axis=2)
    mask = jnp.arange(T)[None, :] < inputs_len[:, None]
    scores = jnp.where(mask, scores, -1e30)
    att = jax.nn.softmax(scores, axis=1)
    enc_raw = jnp.sum(att[:, :, None] * hs, axis=1)
    enc = jnp.tanh(jnp.dot(enc_raw, model.w_fc, precision=hp) + model.b_fc)

    def euclid(a, b):
        return jnp.sum((a[:, None, :] - b[None, :, :]) ** 2, axis=2)

    if training:
        grouped = enc.reshape(model.class_num, model.samples_per_class, -1)
        supports = grouped[:, :model.support_num, :]
        queries = grouped[:, -model.query_num:, :]
        new_protos = alpha * prototypes + (1 - alpha) * jnp.mean(supports, axis=1)
        d = euclid(queries.reshape(model.class_num * model.query_num, -1), new_protos)
        return jax.nn.softmax(-d, axis=1), new_protos, enc, att
    d = euclid(enc, prototypes)
    return jax.nn.softmax(-d, axis=1), prototypes, enc, att


if __name__ == "__main__":
    class_num, proto_dim = 4, 32
    support_num, samples_per_class = 3, 4
    vocab, embed_dim, hidden = 50, 16, 32
    T = 8

    model = ProtoNetPallas(jax.random.PRNGKey(0),
                           class_num=class_num, proto_dim=proto_dim,
                           support_num=support_num,
                           samples_per_class=samples_per_class,
                           vocab_size=vocab, embed_dim=embed_dim,
                           hidden_dim=hidden)

    kd = jax.random.split(jax.random.PRNGKey(0), 4)
    # training episode: class_num * samples_per_class samples
    Btr = class_num * samples_per_class
    tr_inputs = jax.random.randint(kd[0], (Btr, T), 0, vocab, dtype=jnp.int32)
    tr_len = jax.random.randint(kd[1], (Btr,), 2, T + 1, dtype=jnp.int32)
    alpha = 0.5

    cls_tr, protos_tr, enc_tr, att_tr = model.forward(
        tr_inputs, tr_len, alpha=alpha, training=True)

    # eval batch
    Bev = 8
    ev_inputs = jax.random.randint(kd[2], (Bev, T), 0, vocab, dtype=jnp.int32)
    ev_len = jax.random.randint(kd[3], (Bev,), 2, T + 1, dtype=jnp.int32)
    cls_ev, protos_ev, enc_ev, att_ev = model.forward(
        ev_inputs, ev_len, training=False)

    jax.block_until_ready((cls_tr, protos_tr, enc_tr, att_tr,
                           cls_ev, protos_ev, enc_ev, att_ev))

    # reference check
    proto0 = jnp.zeros((class_num, proto_dim), jnp.float32)
    r_cls_tr, r_protos, r_enc_tr, r_att_tr = reference_forward(
        model, tr_inputs, tr_len, proto0, alpha=alpha, training=True)
    r_cls_ev, _, r_enc_ev, r_att_ev = reference_forward(
        model, ev_inputs, ev_len, r_protos, training=False)

    for got, ref in [(cls_tr, r_cls_tr), (protos_tr, r_protos),
                     (enc_tr, r_enc_tr), (att_tr, r_att_tr),
                     (cls_ev, r_cls_ev), (enc_ev, r_enc_ev),
                     (att_ev, r_att_ev)]:
        np.testing.assert_allclose(np.asarray(got), np.asarray(ref),
                                   atol=2e-3, rtol=2e-3)

    print("KERNEL_OK")
</pallas_src>

<mosaic_0001>
module attributes {stable_mosaic.version = 11 : i64} {
  func.func @proto_train_kernel(%arg0: memref<1x1xf32, #tpu.memory_space<smem>>, %arg1: memref<16x8xi32, #tpu.memory_space<vmem>>, %arg2: memref<16x1xi32, #tpu.memory_space<vmem>>, %arg3: memref<128x32xf32, #tpu.memory_space<vmem>>, %arg4: memref<32x32xf32, #tpu.memory_space<vmem>>, %arg5: memref<1x32xf32, #tpu.memory_space<vmem>>, %arg6: memref<32x32xf32, #tpu.memory_space<vmem>>, %arg7: memref<1x32xf32, #tpu.memory_space<vmem>>, %arg8: memref<4x16xf32, #tpu.memory_space<vmem>>, %arg9: memref<4x16xf32, #tpu.memory_space<vmem>>, %arg10: memref<4x32xf32, #tpu.memory_space<vmem>>, %arg11: memref<4x4xf32, #tpu.memory_space<vmem>>, %arg12: memref<4x32xf32, #tpu.memory_space<vmem>>, %arg13: memref<16x32xf32, #tpu.memory_space<vmem>>, %arg14: memref<16x8xf32, #tpu.memory_space<vmem>>) attributes {dimension_semantics = [], scalar_prefetch = 0 : i64, scratch_operands = 0 : i64, tpu.core_type = #tpu.core_type<tc>} {
    %c0 = arith.constant 0 : index
    %c0_0 = arith.constant 0 : index
    %0 = vector.load %arg1[%c0, %c0_0] : memref<16x8xi32, #tpu.memory_space<vmem>>, vector<16x8xi32>
    %c0_1 = arith.constant 0 : index
    %c0_2 = arith.constant 0 : index
    %1 = vector.load %arg2[%c0_1, %c0_2] : memref<16x1xi32, #tpu.memory_space<vmem>>, vector<16x1xi32>
    %c0_3 = arith.constant 0 : index
    %c0_4 = arith.constant 0 : index
    %2 = vector.load %arg3[%c0_3, %c0_4] : memref<128x32xf32, #tpu.memory_space<vmem>>, vector<128x32xf32>
    %c0_5 = arith.constant 0 : index
    %c0_6 = arith.constant 0 : index
    %3 = vector.load %arg4[%c0_5, %c0_6] : memref<32x32xf32, #tpu.memory_space<vmem>>, vector<32x32xf32>
    %c0_7 = arith.constant 0 : index
    %c0_8 = arith.constant 0 : index
    %4 = vector.load %arg5[%c0_7, %c0_8] : memref<1x32xf32, #tpu.memory_space<vmem>>, vector<1x32xf32>
    %c0_9 = arith.constant 0 : index
    %c0_10 = arith.constant 0 : index
    %5 = vector.load %arg6[%c0_9, %c0_10] : memref<32x32xf32, #tpu.memory_space<vmem>>, vector<32x32xf32>
    %c0_11 = arith.constant 0 : index
    %c0_12 = arith.constant 0 : index
    %6 = vector.load %arg7[%c0_11, %c0_12] : memref<1x32xf32, #tpu.memory_space<vmem>>, vector<1x32xf32>
    %7 = tpu.iota {dimensions = array<i32: 1>} : vector<16x128xi32>
    %8 = tpu.iota {dimensions = array<i32: 1>} : vector<16x8xi32>
    %cst = arith.constant 0.000000e+00 : f32
    %9 = vector.broadcast %cst : f32 to vector<16x8xf32>
    %10 = vector.extract_strided_slice %0 {offsets = [0, 0], sizes = [16, 1], strides = [1, 1]} : vector<16x8xi32> to vector<16x1xi32>
    %11 = vector.broadcast %10 : vector<16x1xi32> to vector<16x128xi32>
    %12 = arith.cmpi eq, %11, %7 : vector<16x128xi32>
    %13 = arith.extui %12 : vector<16x128xi1> to vector<16x128xi32>
    %14 = arith.sitofp %13 : vector<16x128xi32> to vector<16x128xf32>
    %cst_13 = arith.constant dense<0.000000e+00> : vector<16x32xf32>
    %15 = tpu.matmul %14, %2, %cst_13 {dimension_numbers = #tpu.dot_dimension_numbers<[1], [0], [0], [1], [0, 0, 1, 1], [], []>} : vector<16x128xf32>, vector<128x32xf32>, vector<16x32xf32> -> vector<16x32xf32>
    %16 = math.tanh %15 : vector<16x32xf32>
    %17 = vector.broadcast %4 : vector<1x32xf32> to vector<16x32xf32>
    %18 = arith.mulf %16, %17 : vector<16x32xf32>
    %cst_14 = arith.constant dense<0.000000e+00> : vector<16xf32>
    %19 = vector.multi_reduction <add>, %18, %cst_14 [1] : vector<16x32xf32> to vector<16xf32>
    %20 = vector.shape_cast %19 : vector<16xf32> to vector<16x1xf32>
    %c0_i32 = arith.constant 0 : i32
    %21 = vector.broadcast %c0_i32 : i32 to vector<16x8xi32>
    %22 = arith.cmpi eq, %8, %21 : vector<16x8xi32>
    %cst_15 = arith.constant 0.000000e+00 : f32
    %23 = vector.shape_cast %20 : vector<16x1xf32> to vector<16x1xf32>
    %24 = vector.broadcast %23 : vector<16x1xf32> to vector<16x8xf32>
    %25 = vector.broadcast %cst_15 : f32 to vector<16x8xf32>
    %26 = arith.select %22, %24, %25 : vector<16x8xi1>, vector<16x8xf32>
    %27 = arith.addf %9, %26 : vector<16x8xf32>
    %28 = vector.extract_strided_slice %0 {offsets = [0, 1], sizes = [16, 1], strides = [1, 1]} : vector<16x8xi32> to vector<16x1xi32>
    %29 = vector.broadcast %28 : vector<16x1xi32> to vector<16x128xi32>
    %30 = arith.cmpi eq, %29, %7 : vector<16x128xi32>
    %31 = arith.extui %30 : vector<16x128xi1> to vector<16x128xi32>
    %32 = arith.sitofp %31 : vector<16x128xi32> to vector<16x128xf32>
    %cst_16 = arith.constant dense<0.000000e+00> : vector<16x32xf32>
    %33 = tpu.matmul %32, %2, %cst_16 {dimension_numbers = #tpu.dot_dimension_numbers<[1], [0], [0], [1], [0, 0, 1, 1], [], []>} : vector<16x128xf32>, vector<128x32xf32>, vector<16x32xf32> -> vector<16x32xf32>
    %cst_17 = arith.constant dense<0.000000e+00> : vector<16x32xf32>
    %34 = tpu.matmul %16, %3, %cst_17 {dimension_numbers = #tpu.dot_dimension_numbers<[1], [0], [0], [1], [0, 0, 1, 1], [], []>} : vector<16x32xf32>, vector<32x32xf32>, vector<16x32xf32> -> vector<16x32xf32>
    %35 = arith.addf %33, %34 : vector<16x32xf32>
    %36 = math.tanh %35 : vector<16x32xf32>
    %37 = vector.broadcast %4 : vector<1x32xf32> to vector<16x32xf32>
    %38 = arith.mulf %36, %37 : vector<16x32xf32>
    %cst_18 = arith.constant dense<0.000000e+00> : vector<16xf32>
    %39 = vector.multi_reduction <add>, %38, %cst_18 [1] : vector<16x32xf32> to vector<16xf32>
    %40 = vector.shape_cast %39 : vector<16xf32> to vector<16x1xf32>
    %c1_i32 = arith.constant 1 : i32
    %41 = vector.broadcast %c1_i32 : i32 to vector<16x8xi32>
    %42 = arith.cmpi eq, %8, %41 : vector<16x8xi32>
    %cst_19 = arith.constant 0.000000e+00 : f32
    %43 = vector.shape_cast %40 : vector<16x1xf32> to vector<16x1xf32>
    %44 = vector.broadcast %43 : vector<16x1xf32> to vector<16x8xf32>
    %45 = vector.broadcast %cst_19 : f32 to vector<16x8xf32>
    %46 = arith.select %42, %44, %45 : vector<16x8xi1>, vector<16x8xf32>
    %47 = arith.addf %27, %46 : vector<16x8xf32>
    %48 = vector.extract_strided_slice %0 {offsets = [0, 2], sizes = [16, 1], strides = [1, 1]} : vector<16x8xi32> to vector<16x1xi32>
    %49 = vector.broadcast %48 : vector<16x1xi32> to vector<16x128xi32>
    %50 = arith.cmpi eq, %49, %7 : vector<16x128xi32>
    %51 = arith.extui %50 : vector<16x128xi1> to vector<16x128xi32>
    %52 = arith.sitofp %51 : vector<16x128xi32> to vector<16x128xf32>
    %cst_20 = arith.constant dense<0.000000e+00> : vector<16x32xf32>
    %53 = tpu.matmul %52, %2, %cst_20 {dimension_numbers = #tpu.dot_dimension_numbers<[1], [0], [0], [1], [0, 0, 1, 1], [], []>} : vector<16x128xf32>, vector<128x32xf32>, vector<16x32xf32> -> vector<16x32xf32>
    %cst_21 = arith.constant dense<0.000000e+00> : vector<16x32xf32>
    %54 = tpu.matmul %36, %3, %cst_21 {dimension_numbers = #tpu.dot_dimension_numbers<[1], [0], [0], [1], [0, 0, 1, 1], [], []>} : vector<16x32xf32>, vector<32x32xf32>, vector<16x32xf32> -> vector<16x32xf32>
    %55 = arith.addf %53, %54 : vector<16x32xf32>
    %56 = math.tanh %55 : vector<16x32xf32>
    %57 = vector.broadcast %4 : vector<1x32xf32> to vector<16x32xf32>
    %58 = arith.mulf %56, %57 : vector<16x32xf32>
    %cst_22 = arith.constant dense<0.000000e+00> : vector<16xf32>
    %59 = vector.multi_reduction <add>, %58, %cst_22 [1] : vector<16x32xf32> to vector<16xf32>
    %60 = vector.shape_cast %59 : vector<16xf32> to vector<16x1xf32>
    %c2_i32 = arith.constant 2 : i32
    %61 = vector.broadcast %c2_i32 : i32 to vector<16x8xi32>
    %62 = arith.cmpi eq, %8, %61 : vector<16x8xi32>
    %cst_23 = arith.constant 0.000000e+00 : f32
    %63 = vector.shape_cast %60 : vector<16x1xf32> to vector<16x1xf32>
    %64 = vector.broadcast %63 : vector<16x1xf32> to vector<16x8xf32>
    %65 = vector.broadcast %cst_23 : f32 to vector<16x8xf32>
    %66 = arith.select %62, %64, %65 : vector<16x8xi1>, vector<16x8xf32>
    %67 = arith.addf %47, %66 : vector<16x8xf32>
    %68 = vector.extract_strided_slice %0 {offsets = [0, 3], sizes = [16, 1], strides = [1, 1]} : vector<16x8xi32> to vector<16x1xi32>
    %69 = vector.broadcast %68 : vector<16x1xi32> to vector<16x128xi32>
    %70 = arith.cmpi eq, %69, %7 : vector<16x128xi32>
    %71 = arith.extui %70 : vector<16x128xi1> to vector<16x128xi32>
    %72 = arith.sitofp %71 : vector<16x128xi32> to vector<16x128xf32>
    %cst_24 = arith.constant dense<0.000000e+00> : vector<16x32xf32>
    %73 = tpu.matmul %72, %2, %cst_24 {dimension_numbers = #tpu.dot_dimension_numbers<[1], [0], [0], [1], [0, 0, 1, 1], [], []>} : vector<16x128xf32>, vector<128x32xf32>, vector<16x32xf32> -> vector<16x32xf32>
    %cst_25 = arith.constant dense<0.000000e+00> : vector<16x32xf32>
    %74 = tpu.matmul %56, %3, %cst_25 {dimension_numbers = #tpu.dot_dimension_numbers<[1], [0], [0], [1], [0, 0, 1, 1], [], []>} : vector<16x32xf32>, vector<32x32xf32>, vector<16x32xf32> -> vector<16x32xf32>
    %75 = arith.addf %73, %74 : vector<16x32xf32>
    %76 = math.tanh %75 : vector<16x32xf32>
    %77 = vector.broadcast %4 : vector<1x32xf32> to vector<16x32xf32>
    %78 = arith.mulf %76, %77 : vector<16x32xf32>
    %cst_26 = arith.constant dense<0.000000e+00> : vector<16xf32>
    %79 = vector.multi_reduction <add>, %78, %cst_26 [1] : vector<16x32xf32> to vector<16xf32>
    %80 = vector.shape_cast %79 : vector<16xf32> to vector<16x1xf32>
    %c3_i32 = arith.constant 3 : i32
    %81 = vector.broadcast %c3_i32 : i32 to vector<16x8xi32>
    %82 = arith.cmpi eq, %8, %81 : vector<16x8xi32>
    %cst_27 = arith.constant 0.000000e+00 : f32
    %83 = vector.shape_cast %80 : vector<16x1xf32> to vector<16x1xf32>
    %84 = vector.broadcast %83 : vector<16x1xf32> to vector<16x8xf32>
    %85 = vector.broadcast %cst_27 : f32 to vector<16x8xf32>
    %86 = arith.select %82, %84, %85 : vector<16x8xi1>, vector<16x8xf32>
    %87 = arith.addf %67, %86 : vector<16x8xf32>
    %88 = vector.extract_strided_slice %0 {offsets = [0, 4], sizes = [16, 1], strides = [1, 1]} : vector<16x8xi32> to vector<16x1xi32>
    %89 = vector.broadcast %88 : vector<16x1xi32> to vector<16x128xi32>
    %90 = arith.cmpi eq, %89, %7 : vector<16x128xi32>
    %91 = arith.extui %90 : vector<16x128xi1> to vector<16x128xi32>
    %92 = arith.sitofp %91 : vector<16x128xi32> to vector<16x128xf32>
    %cst_28 = arith.constant dense<0.000000e+00> : vector<16x32xf32>
    %93 = tpu.matmul %92, %2, %cst_28 {dimension_numbers = #tpu.dot_dimension_numbers<[1], [0], [0], [1], [0, 0, 1, 1], [], []>} : vector<16x128xf32>, vector<128x32xf32>, vector<16x32xf32> -> vector<16x32xf32>
    %cst_29 = arith.constant dense<0.000000e+00> : vector<16x32xf32>
    %94 = tpu.matmul %76, %3, %cst_29 {dimension_numbers = #tpu.dot_dimension_numbers<[1], [0], [0], [1], [0, 0, 1, 1], [], []>} : vector<16x32xf32>, vector<32x32xf32>, vector<16x32xf32> -> vector<16x32xf32>
    %95 = arith.addf %93, %94 : vector<16x32xf32>
    %96 = math.tanh %95 : vector<16x32xf32>
    %97 = vector.broadcast %4 : vector<1x32xf32> to vector<16x32xf32>
    %98 = arith.mulf %96, %97 : vector<16x32xf32>
    %cst_30 = arith.constant dense<0.000000e+00> : vector<16xf32>
    %99 = vector.multi_reduction <add>, %98, %cst_30 [1] : vector<16x32xf32> to vector<16xf32>
    %100 = vector.shape_cast %99 : vector<16xf32> to vector<16x1xf32>
    %c4_i32 = arith.constant 4 : i32
    %101 = vector.broadcast %c4_i32 : i32 to vector<16x8xi32>
    %102 = arith.cmpi eq, %8, %101 : vector<16x8xi32>
    %cst_31 = arith.constant 0.000000e+00 : f32
    %103 = vector.shape_cast %100 : vector<16x1xf32> to vector<16x1xf32>
    %104 = vector.broadcast %103 : vector<16x1xf32> to vector<16x8xf32>
    %105 = vector.broadcast %cst_31 : f32 to vector<16x8xf32>
    %106 = arith.select %102, %104, %105 : vector<16x8xi1>, vector<16x8xf32>
    %107 = arith.addf %87, %106 : vector<16x8xf32>
    %108 = vector.extract_strided_slice %0 {offsets = [0, 5], sizes = [16, 1], strides = [1, 1]} : vector<16x8xi32> to vector<16x1xi32>
    %109 = vector.broadcast %108 : vector<16x1xi32> to vector<16x128xi32>
    %110 = arith.cmpi eq, %109, %7 : vector<16x128xi32>
    %111 = arith.extui %110 : vector<16x128xi1> to vector<16x128xi32>
    %112 = arith.sitofp %111 : vector<16x128xi32> to vector<16x128xf32>
    %cst_32 = arith.constant dense<0.000000e+00> : vector<16x32xf32>
    %113 = tpu.matmul %112, %2, %cst_32 {dimension_numbers = #tpu.dot_dimension_numbers<[1], [0], [0], [1], [0, 0, 1, 1], [], []>} : vector<16x128xf32>, vector<128x32xf32>, vector<16x32xf32> -> vector<16x32xf32>
    %cst_33 = arith.constant dense<0.000000e+00> : vector<16x32xf32>
    %114 = tpu.matmul %96, %3, %cst_33 {dimension_numbers = #tpu.dot_dimension_numbers<[1], [0], [0], [1], [0, 0, 1, 1], [], []>} : vector<16x32xf32>, vector<32x32xf32>, vector<16x32xf32> -> vector<16x32xf32>
    %115 = arith.addf %113, %114 : vector<16x32xf32>
    %116 = math.tanh %115 : vector<16x32xf32>
    %117 = vector.broadcast %4 : vector<1x32xf32> to vector<16x32xf32>
    %118 = arith.mulf %116, %117 : vector<16x32xf32>
    %cst_34 = arith.constant dense<0.000000e+00> : vector<16xf32>
    %119 = vector.multi_reduction <add>, %118, %cst_34 [1] : vector<16x32xf32> to vector<16xf32>
    %120 = vector.shape_cast %119 : vector<16xf32> to vector<16x1xf32>
    %c5_i32 = arith.constant 5 : i32
    %121 = vector.broadcast %c5_i32 : i32 to vector<16x8xi32>
    %122 = arith.cmpi eq, %8, %121 : vector<16x8xi32>
    %cst_35 = arith.constant 0.000000e+00 : f32
    %123 = vector.shape_cast %120 : vector<16x1xf32> to vector<16x1xf32>
    %124 = vector.broadcast %123 : vector<16x1xf32> to vector<16x8xf32>
    %125 = vector.broadcast %cst_35 : f32 to vector<16x8xf32>
    %126 = arith.select %122, %124, %125 : vector<16x8xi1>, vector<16x8xf32>
    %127 = arith.addf %107, %126 : vector<16x8xf32>
    %128 = vector.extract_strided_slice %0 {offsets = [0, 6], sizes = [16, 1], strides = [1, 1]} : vector<16x8xi32> to vector<16x1xi32>
    %129 = vector.broadcast %128 : vector<16x1xi32> to vector<16x128xi32>
    %130 = arith.cmpi eq, %129, %7 : vector<16x128xi32>
    %131 = arith.extui %130 : vector<16x128xi1> to vector<16x128xi32>
    %132 = arith.sitofp %131 : vector<16x128xi32> to vector<16x128xf32>
    %cst_36 = arith.constant dense<0.000000e+00> : vector<16x32xf32>
    %133 = tpu.matmul %132, %2, %cst_36 {dimension_numbers = #tpu.dot_dimension_numbers<[1], [0], [0], [1], [0, 0, 1, 1], [], []>} : vector<16x128xf32>, vector<128x32xf32>, vector<16x32xf32> -> vector<16x32xf32>
    %cst_37 = arith.constant dense<0.000000e+00> : vector<16x32xf32>
    %134 = tpu.matmul %116, %3, %cst_37 {dimension_numbers = #tpu.dot_dimension_numbers<[1], [0], [0], [1], [0, 0, 1, 1], [], []>} : vector<16x32xf32>, vector<32x32xf32>, vector<16x32xf32> -> vector<16x32xf32>
    %135 = arith.addf %133, %134 : vector<16x32xf32>
    %136 = math.tanh %135 : vector<16x32xf32>
    %137 = vector.broadcast %4 : vector<1x32xf32> to vector<16x32xf32>
    %138 = arith.mulf %136, %137 : vector<16x32xf32>
    %cst_38 = arith.constant dense<0.000000e+00> : vector<16xf32>
    %139 = vector.multi_reduction <add>, %138, %cst_38 [1] : vector<16x32xf32> to vector<16xf32>
    %140 = vector.shape_cast %139 : vector<16xf32> to vector<16x1xf32>
    %c6_i32 = arith.constant 6 : i32
    %141 = vector.broadcast %c6_i32 : i32 to vector<16x8xi32>
    %142 = arith.cmpi eq, %8, %141 : vector<16x8xi32>
    %cst_39 = arith.constant 0.000000e+00 : f32
    %143 = vector.shape_cast %140 : vector<16x1xf32> to vector<16x1xf32>
    %144 = vector.broadcast %143 : vector<16x1xf32> to vector<16x8xf32>
    %145 = vector.broadcast %cst_39 : f32 to vector<16x8xf32>
    %146 = arith.select %142, %144, %145 : vector<16x8xi1>, vector<16x8xf32>
    %147 = arith.addf %127, %146 : vector<16x8xf32>
    %148 = vector.extract_strided_slice %0 {offsets = [0, 7], sizes = [16, 1], strides = [1, 1]} : vector<16x8xi32> to vector<16x1xi32>
    %149 = vector.broadcast %148 : vector<16x1xi32> to vector<16x128xi32>
    %150 = arith.cmpi eq, %149, %7 : vector<16x128xi32>
    %151 = arith.extui %150 : vector<16x128xi1> to vector<16x128xi32>
    %152 = arith.sitofp %151 : vector<16x128xi32> to vector<16x128xf32>
    %cst_40 = arith.constant dense<0.000000e+00> : vector<16x32xf32>
    %153 = tpu.matmul %152, %2, %cst_40 {dimension_numbers = #tpu.dot_dimension_numbers<[1], [0], [0], [1], [0, 0, 1, 1], [], []>} : vector<16x128xf32>, vector<128x32xf32>, vector<16x32xf32> -> vector<16x32xf32>
    %cst_41 = arith.constant dense<0.000000e+00> : vector<16x32xf32>
    %154 = tpu.matmul %136, %3, %cst_41 {dimension_numbers = #tpu.dot_dimension_numbers<[1], [0], [0], [1], [0, 0, 1, 1], [], []>} : vector<16x32xf32>, vector<32x32xf32>, vector<16x32xf32> -> vector<16x32xf32>
    %155 = arith.addf %153, %154 : vector<16x32xf32>
    %156 = math.tanh %155 : vector<16x32xf32>
    %157 = vector.broadcast %4 : vector<1x32xf32> to vector<16x32xf32>
    %158 = arith.mulf %156, %157 : vector<16x32xf32>
    %cst_42 = arith.constant dense<0.000000e+00> : vector<16xf32>
    %159 = vector.multi_reduction <add>, %158, %cst_42 [1] : vector<16x32xf32> to vector<16xf32>
    %160 = vector.shape_cast %159 : vector<16xf32> to vector<16x1xf32>
    %c7_i32 = arith.constant 7 : i32
    %161 = vector.broadcast %c7_i32 : i32 to vector<16x8xi32>
    %162 = arith.cmpi eq, %8, %161 : vector<16x8xi32>
    %cst_43 = arith.constant 0.000000e+00 : f32
    %163 = vector.shape_cast %160 : vector<16x1xf32> to vector<16x1xf32>
    %164 = vector.broadcast %163 : vector<16x1xf32> to vector<16x8xf32>
    %165 = vector.broadcast %cst_43 : f32 to vector<16x8xf32>
    %166 = arith.select %162, %164, %165 : vector<16x8xi1>, vector<16x8xf32>
    %167 = arith.addf %147, %166 : vector<16x8xf32>
    %168 = vector.broadcast %1 : vector<16x1xi32> to vector<16x8xi32>
    %169 = arith.cmpi slt, %8, %168 : vector<16x8xi32>
    %cst_44 = arith.constant -1.000000e+30 : f32
    %170 = vector.broadcast %cst_44 : f32 to vector<16x8xf32>
    %171 = arith.select %169, %167, %170 : vector<16x8xi1>, vector<16x8xf32>
    %cst_45 = arith.constant dense<0xFF800000> : vector<16xf32>
    %172 = vector.multi_reduction <maximumf>, %171, %cst_45 [1] : vector<16x8xf32> to vector<16xf32>
    %173 = vector.shape_cast %172 : vector<16xf32> to vector<16x1xf32>
    %174 = vector.broadcast %173 : vector<16x1xf32> to vector<16x8xf32>
    %175 = arith.subf %171, %174 : vector<16x8xf32>
    %176 = math.exp %175 : vector<16x8xf32>
    %cst_46 = arith.constant 0.000000e+00 : f32
    %177 = vector.broadcast %cst_46 : f32 to vector<16x8xf32>
    %178 = arith.select %169, %176, %177 : vector<16x8xi1>, vector<16x8xf32>
    %cst_47 = arith.constant dense<0.000000e+00> : vector<16xf32>
    %179 = vector.multi_reduction <add>, %178, %cst_47 [1] : vector<16x8xf32> to vector<16xf32>
    %180 = vector.shape_cast %179 : vector<16xf32> to vector<16x1xf32>
    %181 = tpu.reciprocal %180 {approx = true} : vector<16x1xf32> -> vector<16x1xf32>
    %182 = vector.broadcast %181 : vector<16x1xf32> to vector<16x8xf32>
    %183 = arith.mulf %178, %182 : vector<16x8xf32>
    %184 = vector.extract_strided_slice %183 {offsets = [0, 0], sizes = [16, 1], strides = [1, 1]} : vector<16x8xf32> to vector<16x1xf32>
    %185 = vector.broadcast %184 : vector<16x1xf32> to vector<16x32xf32>
    %186 = arith.mulf %185, %16 : vector<16x32xf32>
    %187 = vector.extract_strided_slice %183 {offsets = [0, 1], sizes = [16, 1], strides = [1, 1]} : vector<16x8xf32> to vector<16x1xf32>
    %188 = vector.broadcast %187 : vector<16x1xf32> to vector<16x32xf32>
    %189 = arith.mulf %188, %36 : vector<16x32xf32>
    %190 = arith.addf %186, %189 : vector<16x32xf32>
    %191 = vector.extract_strided_slice %183 {offsets = [0, 2], sizes = [16, 1], strides = [1, 1]} : vector<16x8xf32> to vector<16x1xf32>
    %192 = vector.broadcast %191 : vector<16x1xf32> to vector<16x32xf32>
    %193 = arith.mulf %192, %56 : vector<16x32xf32>
    %194 = arith.addf %190, %193 : vector<16x32xf32>
    %195 = vector.extract_strided_slice %183 {offsets = [0, 3], sizes = [16, 1], strides = [1, 1]} : vector<16x8xf32> to vector<16x1xf32>
    %196 = vector.broadcast %195 : vector<16x1xf32> to vector<16x32xf32>
    %197 = arith.mulf %196, %76 : vector<16x32xf32>
    %198 = arith.addf %194, %197 : vector<16x32xf32>
    %199 = vector.extract_strided_slice %183 {offsets = [0, 4], sizes = [16, 1], strides = [1, 1]} : vector<16x8xf32> to vector<16x1xf32>
    %200 = vector.broadcast %199 : vector<16x1xf32> to vector<16x32xf32>
    %201 = arith.mulf %200, %96 : vector<16x32xf32>
    %202 = arith.addf %198, %201 : vector<16x32xf32>
    %203 = vector.extract_strided_slice %183 {offsets = [0, 5], sizes = [16, 1], strides = [1, 1]} : vector<16x8xf32> to vector<16x1xf32>
    %204 = vector.broadcast %203 : vector<16x1xf32> to vector<16x32xf32>
    %205 = arith.mulf %204, %116 : vector<16x32xf32>
    %206 = arith.addf %202, %205 : vector<16x32xf32>
    %207 = vector.extract_strided_slice %183 {offsets = [0, 6], sizes = [16, 1], strides = [1, 1]} : vector<16x8xf32> to vector<16x1xf32>
    %208 = vector.broadcast %207 : vector<16x1xf32> to vector<16x32xf32>
    %209 = arith.mulf %208, %136 : vector<16x32xf32>
    %210 = arith.addf %206, %209 : vector<16x32xf32>
    %211 = vector.extract_strided_slice %183 {offsets = [0, 7], sizes = [16, 1], strides = [1, 1]} : vector<16x8xf32> to vector<16x1xf32>
    %212 = vector.broadcast %211 : vector<16x1xf32> to vector<16x32xf32>
    %213 = arith.mulf %212, %156 : vector<16x32xf32>
    %214 = arith.addf %210, %213 : vector<16x32xf32>
    %cst_48 = arith.constant dense<0.000000e+00> : vector<16x32xf32>
    %215 = tpu.matmul %214, %5, %cst_48 {dimension_numbers = #tpu.dot_dimension_numbers<[1], [0], [0], [1], [0, 0, 1, 1], [], []>} : vector<16x32xf32>, vector<32x32xf32>, vector<16x32xf32> -> vector<16x32xf32>
    %216 = vector.broadcast %6 : vector<1x32xf32> to vector<16x32xf32>
    %217 = arith.addf %215, %216 : vector<16x32xf32>
    %218 = math.tanh %217 : vector<16x32xf32>
    %c0_49 = arith.constant 0 : index
    %c0_50 = arith.constant 0 : index
    %219 = vector.load %arg13[%c0_49, %c0_50] : memref<16x32xf32, #tpu.memory_space<vmem>>, vector<16x32xf32>
    tpu.vector_store %arg13[%c0_49, %c0_50], %218 {strides = array<i32>} : memref<16x32xf32, #tpu.memory_space<vmem>>, vector<16x32xf32>,
    %c0_51 = arith.constant 0 : index
    %c0_52 = arith.constant 0 : index
    %220 = vector.load %arg14[%c0_51, %c0_52] : memref<16x8xf32, #tpu.memory_space<vmem>>, vector<16x8xf32>
    tpu.vector_store %arg14[%c0_51, %c0_52], %183 {strides = array<i32>} : memref<16x8xf32, #tpu.memory_space<vmem>>, vector<16x8xf32>,
    %c0_53 = arith.constant 0 : index
    %c0_54 = arith.constant 0 : index
    %221 = memref.load %arg0[%c0_53, %c0_54] : memref<1x1xf32, #tpu.memory_space<smem>>
    %c0_55 = arith.constant 0 : index
    %c0_56 = arith.constant 0 : index
    %222 = vector.load %arg8[%c0_55, %c0_56] : memref<4x16xf32, #tpu.memory_space<vmem>>, vector<4x16xf32>
    %cst_57 = arith.constant dense<0.000000e+00> : vector<4x32xf32>
    %223 = tpu.matmul %222, %218, %cst_57 {dimension_numbers = #tpu.dot_dimension_numbers<[1], [0], [0], [1], [0, 0, 1, 1], [], []>} : vector<4x16xf32>, vector<16x32xf32>, vector<4x32xf32> -> vector<4x32xf32>
    %c0_58 = arith.constant 0 : index
    %c0_59 = arith.constant 0 : index
    %224 = vector.load %arg10[%c0_58, %c0_59] : memref<4x32xf32, #tpu.memory_space<vmem>>, vector<4x32xf32>
    %225 = vector.broadcast %221 : f32 to vector<4x32xf32>
    %226 = arith.mulf %225, %224 : vector<4x32xf32>
    %cst_60 = arith.constant 1.000000e+00 : f32
    %227 = arith.subf %cst_60, %221 : f32
    %228 = vector.broadcast %227 : f32 to vector<4x32xf32>
    %229 = arith.mulf %228, %223 : vector<4x32xf32>
    %230 = arith.addf %226, %229 : vector<4x32xf32>
    %c0_61 = arith.constant 0 : index
    %c0_62 = arith.constant 0 : index
    %231 = vector.load %arg12[%c0_61, %c0_62] : memref<4x32xf32, #tpu.memory_space<vmem>>, vector<4x32xf32>
    tpu.vector_store %arg12[%c0_61, %c0_62], %230 {strides = array<i32>} : memref<4x32xf32, #tpu.memory_space<vmem>>, vector<4x32xf32>,
    %c0_63 = arith.constant 0 : index
    %c0_64 = arith.constant 0 : index
    %232 = vector.load %arg9[%c0_63, %c0_64] : memref<4x16xf32, #tpu.memory_space<vmem>>, vector<4x16xf32>
    %cst_65 = arith.constant dense<0.000000e+00> : vector<4x32xf32>
    %233 = tpu.matmul %232, %218, %cst_65 {dimension_numbers = #tpu.dot_dimension_numbers<[1], [0], [0], [1], [0, 0, 1, 1], [], []>} : vector<4x16xf32>, vector<16x32xf32>, vector<4x32xf32> -> vector<4x32xf32>
    %cst_66 = arith.constant dense<0.000000e+00> : vector<4x4xf32>
    %234 = tpu.matmul %233, %230, %cst_66 {dimension_numbers = #tpu.dot_dimension_numbers<[1], [1], [0], [0], [0, 0, 1, 0], [], []>} : vector<4x32xf32>, vector<4x32xf32>, vector<4x4xf32> -> vector<4x4xf32>
    %235 = arith.mulf %233, %233 : vector<4x32xf32>
    %cst_67 = arith.constant dense<0.000000e+00> : vector<4xf32>
    %236 = vector.multi_reduction <add>, %235, %cst_67 [1] : vector<4x32xf32> to vector<4xf32>
    %237 = vector.shape_cast %236 : vector<4xf32> to vector<4x1xf32>
    %cst_68 = arith.constant 1.000000e+00 : f32
    %238 = vector.broadcast %cst_68 : f32 to vector<1x32xf32>
    %239 = arith.mulf %230, %230 : vector<4x32xf32>
    %cst_69 = arith.constant dense<0.000000e+00> : vector<1x4xf32>
    %240 = tpu.matmul %238, %239, %cst_69 {dimension_numbers = #tpu.dot_dimension_numbers<[1], [1], [0], [0], [0, 0, 1, 0], [], []>} : vector<1x32xf32>, vector<4x32xf32>, vector<1x4xf32> -> vector<1x4xf32>
    %cst_70 = arith.constant 2.000000e+00 : f32
    %241 = vector.broadcast %cst_70 : f32 to vector<4x4xf32>
    %242 = arith.mulf %241, %234 : vector<4x4xf32>
    %243 = vector.broadcast %237 : vector<4x1xf32> to vector<4x4xf32>
    %244 = arith.subf %242, %243 : vector<4x4xf32>
    %245 = vector.broadcast %240 : vector<1x4xf32> to vector<4x4xf32>
    %246 = arith.subf %244, %245 : vector<4x4xf32>
    %cst_71 = arith.constant dense<0xFF800000> : vector<4xf32>
    %247 = vector.multi_reduction <maximumf>, %246, %cst_71 [1] : vector<4x4xf32> to vector<4xf32>
    %248 = vector.shape_cast %247 : vector<4xf32> to vector<4x1xf32>
    %249 = vector.broadcast %248 : vector<4x1xf32> to vector<4x4xf32>
    %250 = arith.subf %246, %249 : vector<4x4xf32>
    %251 = math.exp %250 : vector<4x4xf32>
    %cst_72 = arith.constant dense<0.000000e+00> : vector<4xf32>
    %252 = vector.multi_reduction <add>, %251, %cst_72 [1] : vector<4x4xf32> to vector<4xf32>
    %253 = vector.shape_cast %252 : vector<4xf32> to vector<4x1xf32>
    %254 = tpu.reciprocal %253 {approx = true} : vector<4x1xf32> -> vector<4x1xf32>
    %255 = vector.broadcast %254 : vector<4x1xf32> to vector<4x4xf32>
    %256 = arith.mulf %251, %255 : vector<4x4xf32>
    %c0_73 = arith.constant 0 : index
    %c0_74 = arith.constant 0 : index
    %257 = vector.load %arg11[%c0_73, %c0_74] : memref<4x4xf32, #tpu.memory_space<vmem>>, vector<4x4xf32>
    tpu.vector_store %arg11[%c0_73, %c0_74], %256 {strides = array<i32>} : memref<4x4xf32, #tpu.memory_space<vmem>>, vector<4x4xf32>,
    return
  }
}

</mosaic_0001>

<llo_original>
// kernel: tpu_custom_call.1
$region0: #{tpu_custom_call.1}
  #allocation0 [shape = 'u32[]', space=smem, size = 0x4, offset = 0x4, fixed_abs, tag = 'smem constant byte address 0x4 - core index']
  #allocation1 [shape = 'u32[144,128]{1,0:T(1,128)}', space=vmem, size = 0x12000, scoped, tag = 'internal scratch']
  #allocation2 [shape = 'f32[1,1]{1,0:T(1,128)S(6)}', space=smem, size = 0x200, scoped, tag = 'scoped memory for tpu_custom_call.1']
  %s0 = inlined_call_operand.<no memory space> [shape: f32[1,1], index: 0, kind: input, shape index: {}]
  %s1 = inlined_call_operand.vmem [shape: s32[16,8], index: 1, kind: input, shape index: {}]
  %s2 = inlined_call_operand.vmem [shape: s32[16,1], index: 2, kind: input, shape index: {}]
  %s3 = inlined_call_operand.vmem [shape: f32[128,32], index: 3, kind: input, shape index: {}]
  %s4 = inlined_call_operand.vmem [shape: f32[32,32], index: 4, kind: input, shape index: {}]
  %s5 = inlined_call_operand.vmem [shape: f32[1,32], index: 5, kind: input, shape index: {}]
  %s6 = inlined_call_operand.vmem [shape: f32[32,32], index: 6, kind: input, shape index: {}]
  %s7 = inlined_call_operand.vmem [shape: f32[1,32], index: 7, kind: input, shape index: {}]
  %s8 = inlined_call_operand.vmem [shape: f32[4,16], index: 8, kind: input, shape index: {}]
  %s9 = inlined_call_operand.vmem [shape: f32[4,16], index: 9, kind: input, shape index: {}]
  %s10 = inlined_call_operand.vmem [shape: f32[4,32], index: 10, kind: input, shape index: {}, may-alias: {10,12}]
  %s11 = inlined_call_operand.hbm [shape: f32[4,4], index: 11, kind: output, shape index: {0}]
  %s12 = inlined_call_operand.vmem [shape: f32[4,32], index: 12, kind: output, shape index: {1}, may-alias: {10,12}]
  %s13 = inlined_call_operand.hbm [shape: f32[16,32], index: 13, kind: output, shape index: {2}]
  %s14 = inlined_call_operand.vmem [shape: f32[16,8], index: 14, kind: output, shape index: {3}]
  %15 = xla_tuple %s11, %s12, %s13, %s14
  %s16 = sld [smem:[#allocation0]]
  $region78: #{tpu_custom_call.1} parent=0
    _
  %s18 = ssub.s32 1, %s16
  %s19 = scalar_select 0, %s18, %s16
  %20 = sst [smem:[#allocation2]] %s0
  $region1: #{tpu_custom_call.1} parent=0
    #allocation3 [shape = 'u8[2048]{0}', space=vmem, size = 0x800, scoped, tag = 'output window, operand 0, single buffered']
    #allocation4 [shape = 's32[1]{0}', space=sflag, size = 0x4, scoped, tag = 'scoped memory for tpu_custom_call.1']
    #allocation5 [shape = 'u8[8192]{0}', space=vmem, size = 0x2000, scoped, tag = 'output window, operand 2, single buffered']
    #allocation6 [shape = 's32[1]{0}', space=sflag, size = 0x4, scoped, tag = 'scoped memory for tpu_custom_call.1']
    %21 = vsyncpa [#allocation4], 0
    %22 = vsyncpa [#allocation6], 0
    // Predicated region
    $region2: #{tpu_custom_call.1} parent=1 // pred_check
      _
    $region3: #{tpu_custom_call.1} parent=1 // pred_check_branch
      %24 = sbr.rel (0) target = $region5
    $region4: #{tpu_custom_call.1} parent=1 // pred_region
      _
    $region5: #{tpu_custom_call.1} parent=1 // pred_fallthru
      _
    // Predicated region
    $region6: #{tpu_custom_call.1} parent=1 // pred_check
      _
    $region7: #{tpu_custom_call.1} parent=1 // pred_check_branch
      %26 = sbr.rel (0) target = $region9
    $region8: #{tpu_custom_call.1} parent=1 // pred_region
      _
    $region9: #{tpu_custom_call.1} parent=1 // pred_fallthru
      _
    // Predicated region
    $region10: #{tpu_custom_call.1} parent=1 // pred_check
      _
    $region11: #{tpu_custom_call.1} parent=1 // pred_check_branch
      %28 = sbr.rel (0) target = $region13
    $region12: #{tpu_custom_call.1} parent=1 // pred_region
      _
    $region13: #{tpu_custom_call.1} parent=1 // pred_fallthru
      _
    // Predicated region
    $region14: #{tpu_custom_call.1} parent=1 // pred_check
      _
    $region15: #{tpu_custom_call.1} parent=1 // pred_check_branch
      %30 = sbr.rel (0) target = $region17
    $region16: #{tpu_custom_call.1} parent=1 // pred_region
      _
    $region17: #{tpu_custom_call.1} parent=1 // pred_fallthru
      _
    // Predicated region
    $region18: #{tpu_custom_call.1} parent=1 // pred_check
      _
    $region19: #{tpu_custom_call.1} parent=1 // pred_check_branch
      %32 = sbr.rel (0) target = $region21
    $region20: #{tpu_custom_call.1} parent=1 // pred_region
      _
    $region21: #{tpu_custom_call.1} parent=1 // pred_fallthru
      _
    // Predicated region
    $region22: #{tpu_custom_call.1} parent=1 // pred_check
      _
    $region23: #{tpu_custom_call.1} parent=1 // pred_check_branch
      %34 = sbr.rel (0) target = $region25
    $region24: #{tpu_custom_call.1} parent=1 // pred_region
      _
    $region25: #{tpu_custom_call.1} parent=1 // pred_fallthru
      _
    // Predicated region
    $region26: #{tpu_custom_call.1} parent=1 // pred_check
      _
    $region27: #{tpu_custom_call.1} parent=1 // pred_check_branch
      %36 = sbr.rel (0) target = $region29
    $region28: #{tpu_custom_call.1} parent=1 // pred_region
      _
    $region29: #{tpu_custom_call.1} parent=1 // pred_fallthru
      _
    // Predicated region
    $region30: #{tpu_custom_call.1} parent=1 // pred_check
      _
    $region31: #{tpu_custom_call.1} parent=1 // pred_check_branch
      %38 = sbr.rel (0) target = $region33
    $region32: #{tpu_custom_call.1} parent=1 // pred_region
      _
    $region33: #{tpu_custom_call.1} parent=1 // pred_fallthru
      _
    // Predicated region
    $region34: #{tpu_custom_call.1} parent=1 // pred_check
      _
    $region35: #{tpu_custom_call.1} parent=1 // pred_check_branch
      %40 = sbr.rel (0) target = $region37
    $region36: #{tpu_custom_call.1} parent=1 // pred_region
      _
    $region37: #{tpu_custom_call.1} parent=1 // pred_fallthru
      _
    // Predicated region
    $region38: #{tpu_custom_call.1} parent=1 // pred_check
      _
    $region39: #{tpu_custom_call.1} parent=1 // pred_check_branch
      %42 = sbr.rel (0) target = $region41
    $region40: #{tpu_custom_call.1} parent=1 // pred_region
      _
    $region41: #{tpu_custom_call.1} parent=1 // pred_fallthru
      _
    // Predicated region
    $region42: #{tpu_custom_call.1} parent=1 // pred_check
      _
    $region43: #{tpu_custom_call.1} parent=1 // pred_check_branch
      %44 = sbr.rel (0) target = $region45
    $region44: #{tpu_custom_call.1} parent=1 // pred_region
      _
    $region45: #{tpu_custom_call.1} parent=1 // pred_fallthru
      _
    %v45 = vld [vmem:[%s1] sm:$0xff]
    %v46 = vld [vmem:[%s1 + $0x8] sm:$0xff]
    %v47 = vld [vmem:[%s2] sm:$0xff]
    %v48 = vld [vmem:[%s2 + $0x8] sm:$0xff]
    %v49 = vld [vmem:[%s3] sm:$0xff]
    %v50 = vld [vmem:[%s3 + $0x8] sm:$0xff]
    %v51 = vld [vmem:[%s3 + $0x10] sm:$0xff]
    %v52 = vld [vmem:[%s3 + $0x18] sm:$0xff]
    %v53 = vld [vmem:[%s3 + $0x20] sm:$0xff]
    %v54 = vld [vmem:[%s3 + $0x28] sm:$0xff]
    %v55 = vld [vmem:[%s3 + $0x30] sm:$0xff]
    %v56 = vld [vmem:[%s3 + $0x38] sm:$0xff]
    %v57 = vld [vmem:[%s3 + $0x40] sm:$0xff]
    %v58 = vld [vmem:[%s3 + $0x48] sm:$0xff]
    %v59 = vld [vmem:[%s3 + $0x50] sm:$0xff]
    %v60 = vld [vmem:[%s3 + $0x58] sm:$0xff]
    %v61 = vld [vmem:[%s3 + $0x60] sm:$0xff]
    %v62 = vld [vmem:[%s3 + $0x68] sm:$0xff]
    %v63 = vld [vmem:[%s3 + $0x70] sm:$0xff]
    %v64 = vld [vmem:[%s3 + $0x78] sm:$0xff]
    %v65 = vld [vmem:[%s4] sm:$0xff]
    %v66 = vld [vmem:[%s4 + $0x8] sm:$0xff]
    %v67 = vld [vmem:[%s4 + $0x10] sm:$0xff]
    %v68 = vld [vmem:[%s4 + $0x18] sm:$0xff]
    %v69 = vld [vmem:[%s5] sm:$0x1]
    %v70 = vld [vmem:[%s6] sm:$0xff]
    %v71 = vld [vmem:[%s6 + $0x8] sm:$0xff]
    %v72 = vld [vmem:[%s6 + $0x10] sm:$0xff]
    %v73 = vld [vmem:[%s6 + $0x18] sm:$0xff]
    %v74 = vld [vmem:[%s7] sm:$0x1]
    %v75 = vlaneseq
    %v76 = vand.u32 %v75, 127
    %77 = vset.pattern.permute.xlu0 0
    %78 = vperm.xlu0 %77, %v45
    %v79 = vpop.permute.xlu0 %78
    %80 = vset.pattern.permute.xlu0 0
    %81 = vperm.xlu0 %80, %v46
    %v82 = vpop.permute.xlu0 %81
    %vm83 = vcmp.eq.s32.totalorder %v79, %v76
    %vm84 = vcmp.eq.s32.totalorder %v82, %v76
    %v85 = vsel %vm83, 1, 0
    %v86 = vsel %vm84, 1, 0
    %v87 = vcvt.s32.f32 %v85
    %v88 = vcvt.s32.f32 %v86
    %89 = vmatprep.subr.mxu0 0.0
    %90 = vmatpush1.msra.mxu0 %v64
    %91 = vmatprep.subr.mxu0 0.0
    %92 = vmatpush1.msra.mxu0 %v63
    %93 = vmatprep.subr.mxu0 0.0
    %94 = vmatpush1.msra.mxu0 %v62
    %95 = vmatprep.subr.mxu0 0.0
    %96 = vmatpush1.msra.mxu0 %v61
    %97 = vmatprep.subr.mxu0 0.0
    %98 = vmatpush1.msra.mxu0 %v60
    %99 = vmatprep.subr.mxu0 0.0
    %100 = vmatpush1.msra.mxu0 %v59
    %101 = vmatprep.subr.mxu0 0.0
    %102 = vmatpush1.msra.mxu0 %v58
    %103 = vmatprep.subr.mxu0 0.0
    %104 = vmatpush1.msra.mxu0 %v57
    %105 = vmatprep.subr.mxu0 0.0
    %106 = vmatpush1.msra.mxu0 %v56
    %107 = vmatprep.subr.mxu0 0.0
    %108 = vmatpush1.msra.mxu0 %v55
    %109 = vmatprep.subr.mxu0 0.0
    %110 = vmatpush1.msra.mxu0 %v54
    %111 = vmatprep.subr.mxu0 0.0
    %112 = vmatpush1.msra.mxu0 %v53
    %113 = vmatprep.subr.mxu0 0.0
    %114 = vmatpush1.msra.mxu0 %v52
    %115 = vmatprep.subr.mxu0 0.0
    %116 = vmatpush1.msra.mxu0 %v51
    %117 = vmatprep.subr.mxu0 0.0
    %118 = vmatpush1.msra.mxu0 %v50
    %119 = vmatprep.subr.mxu0 0.0
    %120 = vmatpush1.msra.mxu0 %v49
    %121 = vmatprep.subr.mxu0 0.0
    %122 = vmatpush2.msra.mxu0 0.0
    %123 = vmatprep.subr.mxu0 0.0
    %124 = vmatpush2.msra.mxu0 0.0
    %125 = vmatprep.subr.mxu0 0.0
    %126 = vmatpush2.msra.mxu0 0.0
    %127 = vmatprep.subr.mxu0 0.0
    %128 = vmatpush2.msra.mxu0 0.0
    %129 = vmatprep.subr.mxu0 0.0
    %130 = vmatpush2.msra.mxu0 0.0
    %131 = vmatprep.subr.mxu0 0.0
    %132 = vmatpush2.msra.mxu0 0.0
    %133 = vmatprep.subr.mxu0 0.0
    %134 = vmatpush2.msra.mxu0 0.0
    %135 = vmatprep.subr.mxu0 0.0
    %136 = vmatpush2.msra.mxu0 0.0
    %137 = vmatprep.subr.mxu0 0.0
    %138 = vmatpush2.msra.mxu0 0.0
    %139 = vmatprep.subr.mxu0 0.0
    %140 = vmatpush2.msra.mxu0 0.0
    %141 = vmatprep.subr.mxu0 0.0
    %142 = vmatpush2.msra.mxu0 0.0
    %143 = vmatprep.subr.mxu0 0.0
    %144 = vmatpush2.msra.mxu0 0.0
    %145 = vmatprep.subr.mxu0 0.0
    %146 = vmatpush2.msra.mxu0 0.0
    %147 = vmatprep.subr.mxu0 0.0
    %148 = vmatpush2.msra.mxu0 0.0
    %149 = vmatprep.subr.mxu0 0.0
    %150 = vmatpush2.msra.mxu0 0.0
    %151 = vmatprep.subr.mxu0 0.0
    %152 = vmatpush2.msra.mxu0 0.0
    %153 = vmatprep.mubr.f32.mxu0 0.0
    %154 = vmatmul.mubr.f32.gmra.mxu0 %v87
    %v155 = vpop.f32.mrf.mxu0
    %v156 = vadd.f32 0.0, %v155
    %v157 = vpop.f32.mrf.mxu0
    %158 = vmatprep.mubr.f32.mxu0 0.0
    %159 = vmatmul.mubr.f32.gmra.mxu0 %v88
    %v160 = vpop.f32.mrf.mxu0
    %v161 = vadd.f32 0.0, %v160
    %v162 = vpop.f32.mrf.mxu0
    %163 = vdwg.mxu0
    %v164 = vtanh.pop %v156
    %v165 = vtanh.pop %v161
    %v167 = vlaneseq
    %v168 = vshrl.u32 %v167, 7
    %v169 = vsub.s32 0, %v168
    %v170 = vrot.slane %v69, %v169
    %v172 = vmul.f32 %v164, %v170
    %v173 = vmul.f32 %v165, %v170
    %vm174 = vcmask 261120
    %v175 = vsel %vm174, %v172, 0.0
    %176 = vadd.xlane.f32.xlu0 %v175
    %v177 = vpop.xlane.xlu0 %176
    %v178 = vsel %vm174, %v173, 0.0
    %179 = vadd.xlane.f32.xlu0 %v178
    %v180 = vpop.xlane.xlu0 %179
    %vm181 = vcmp.eq.s32.totalorder %v76, 0
    %v182 = vsel %vm181, %v177, 0.0
    %v183 = vsel %vm181, %v180, 0.0
    %v184 = vadd.f32 %v182, 0.0
    %v185 = vadd.f32 %v183, 0.0
    %186 = vset.pattern.permute.xlu0 1
    %187 = vperm.xlu0 %186, %v45
    %v188 = vpop.permute.xlu0 %187
    %189 = vset.pattern.permute.xlu0 1
    %190 = vperm.xlu0 %189, %v46
    %v191 = vpop.permute.xlu0 %190
    %vm192 = vcmp.eq.s32.totalorder %v188, %v76
    %vm193 = vcmp.eq.s32.totalorder %v191, %v76
    %v194 = vsel %vm192, 1, 0
    %v195 = vsel %vm193, 1, 0
    %v196 = vcvt.s32.f32 %v194
    %v197 = vcvt.s32.f32 %v195
    %v199 = vsel %vm174, %v164, 0
    %v202 = vsel %vm174, %v165, 0
    %204 = vmatprep.subr.mxu0 0.0
    %205 = vmatpush1.msra.mxu0 0.0
    %206 = vmatprep.subr.mxu0 0.0
    %207 = vmatpush1.msra.mxu0 0.0
    %208 = vmatprep.subr.mxu0 0.0
    %209 = vmatpush1.msra.mxu0 0.0
    %210 = vmatprep.subr.mxu0 0.0
    %211 = vmatpush1.msra.mxu0 0.0
    %212 = vmatprep.subr.mxu0 0.0
    %213 = vmatpush1.msra.mxu0 0.0
    %214 = vmatprep.subr.mxu0 0.0
    %215 = vmatpush1.msra.mxu0 0.0
    %216 = vmatprep.subr.mxu0 0.0
    %217 = vmatpush1.msra.mxu0 0.0
    %218 = vmatprep.subr.mxu0 0.0
    %219 = vmatpush1.msra.mxu0 0.0
    %220 = vmatprep.subr.mxu0 0.0
    %221 = vmatpush1.msra.mxu0 0.0
    %222 = vmatprep.subr.mxu0 0.0
    %223 = vmatpush1.msra.mxu0 0.0
    %224 = vmatprep.subr.mxu0 0.0
    %225 = vmatpush1.msra.mxu0 0.0
    %226 = vmatprep.subr.mxu0 0.0
    %227 = vmatpush1.msra.mxu0 0.0
    %228 = vmatprep.subr.mxu0 0.0
    %229 = vmatpush1.msra.mxu0 %v68
    %230 = vmatprep.subr.mxu0 0.0
    %231 = vmatpush1.msra.mxu0 %v67
    %232 = vmatprep.subr.mxu0 0.0
    %233 = vmatpush1.msra.mxu0 %v66
    %234 = vmatprep.subr.mxu0 0.0
    %235 = vmatpush1.msra.mxu0 %v65
    %236 = vmatprep.subr.mxu0 0.0
    %237 = vmatpush2.msra.mxu0 0.0
    %238 = vmatprep.subr.mxu0 0.0
    %239 = vmatpush2.msra.mxu0 0.0
    %240 = vmatprep.subr.mxu0 0.0
    %241 = vmatpush2.msra.mxu0 0.0
    %242 = vmatprep.subr.mxu0 0.0
    %243 = vmatpush2.msra.mxu0 0.0
    %244 = vmatprep.subr.mxu0 0.0
    %245 = vmatpush2.msra.mxu0 0.0
    %246 = vmatprep.subr.mxu0 0.0
    %247 = vmatpush2.msra.mxu0 0.0
    %248 = vmatprep.subr.mxu0 0.0
    %249 = vmatpush2.msra.mxu0 0.0
    %250 = vmatprep.subr.mxu0 0.0
    %251 = vmatpush2.msra.mxu0 0.0
    %252 = vmatprep.subr.mxu0 0.0
    %253 = vmatpush2.msra.mxu0 0.0
    %254 = vmatprep.subr.mxu0 0.0
    %255 = vmatpush2.msra.mxu0 0.0
    %256 = vmatprep.subr.mxu0 0.0
    %257 = vmatpush2.msra.mxu0 0.0
    %258 = vmatprep.subr.mxu0 0.0
    %259 = vmatpush2.msra.mxu0 0.0
    %260 = vmatprep.subr.mxu0 0.0
    %261 = vmatpush2.msra.mxu0 0.0
    %262 = vmatprep.subr.mxu0 0.0
    %263 = vmatpush2.msra.mxu0 0.0
    %264 = vmatprep.subr.mxu0 0.0
    %265 = vmatpush2.msra.mxu0 0.0
    %266 = vmatprep.subr.mxu0 0.0
    %267 = vmatpush2.msra.mxu0 0.0
    %268 = vmatprep.mubr.f32.mxu0 0.0
    %269 = vmatmul.mubr.f32.gmra.mxu0 %v199
    %v270 = vpop.f32.mrf.mxu0
    %v271 = vadd.f32 0.0, %v270
    %v272 = vpop.f32.mrf.mxu0
    %273 = vmatprep.mubr.f32.mxu0 0.0
    %274 = vmatmul.mubr.f32.gmra.mxu0 %v202
    %v275 = vpop.f32.mrf.mxu0
    %v276 = vadd.f32 0.0, %v275
    %v277 = vpop.f32.mrf.mxu0
    %278 = vdwg.mxu0
    %279 = vmatprep.subr.mxu0 0.0
    %280 = vmatpush1.msra.mxu0 %v64
    %281 = vmatprep.subr.mxu0 0.0
    %282 = vmatpush1.msra.mxu0 %v63
    %283 = vmatprep.subr.mxu0 0.0
    %284 = vmatpush1.msra.mxu0 %v62
    %285 = vmatprep.subr.mxu0 0.0
    %286 = vmatpush1.msra.mxu0 %v61
    %287 = vmatprep.subr.mxu0 0.0
    %288 = vmatpush1.msra.mxu0 %v60
    %289 = vmatprep.subr.mxu0 0.0
    %290 = vmatpush1.msra.mxu0 %v59
    %291 = vmatprep.subr.mxu0 0.0
    %292 = vmatpush1.msra.mxu0 %v58
    %293 = vmatprep.subr.mxu0 0.0
    %294 = vmatpush1.msra.mxu0 %v57
    %295 = vmatprep.subr.mxu0 0.0
    %296 = vmatpush1.msra.mxu0 %v56
    %297 = vmatprep.subr.mxu0 0.0
    %298 = vmatpush1.msra.mxu0 %v55
    %299 = vmatprep.subr.mxu0 0.0
    %300 = vmatpush1.msra.mxu0 %v54
    %301 = vmatprep.subr.mxu0 0.0
    %302 = vmatpush1.msra.mxu0 %v53
    %303 = vmatprep.subr.mxu0 0.0
    %304 = vmatpush1.msra.mxu0 %v52
    %305 = vmatprep.subr.mxu0 0.0
    %306 = vmatpush1.msra.mxu0 %v51
    %307 = vmatprep.subr.mxu0 0.0
    %308 = vmatpush1.msra.mxu0 %v50
    %309 = vmatprep.subr.mxu0 0.0
    %310 = vmatpush1.msra.mxu0 %v49
    %311 = vmatprep.subr.mxu0 0.0
    %312 = vmatpush2.msra.mxu0 0.0
    %313 = vmatprep.subr.mxu0 0.0
    %314 = vmatpush2.msra.mxu0 0.0
    %315 = vmatprep.subr.mxu0 0.0
    %316 = vmatpush2.msra.mxu0 0.0
    %317 = vmatprep.subr.mxu0 0.0
    %318 = vmatpush2.msra.mxu0 0.0
    %319 = vmatprep.subr.mxu0 0.0
    %320 = vmatpush2.msra.mxu0 0.0
    %321 = vmatprep.subr.mxu0 0.0
    %322 = vmatpush2.msra.mxu0 0.0
    %323 = vmatprep.subr.mxu0 0.0
    %324 = vmatpush2.msra.mxu0 0.0
    %325 = vmatprep.subr.mxu0 0.0
    %326 = vmatpush2.msra.mxu0 0.0
    %327 = vmatprep.subr.mxu0 0.0
    %328 = vmatpush2.msra.mxu0 0.0
    %329 = vmatprep.subr.mxu0 0.0
    %330 = vmatpush2.msra.mxu0 0.0
    %331 = vmatprep.subr.mxu0 0.0
    %332 = vmatpush2.msra.mxu0 0.0
    %333 = vmatprep.subr.mxu0 0.0
    %334 = vmatpush2.msra.mxu0 0.0
    %335 = vmatprep.subr.mxu0 0.0
    %336 = vmatpush2.msra.mxu0 0.0
    %337 = vmatprep.subr.mxu0 0.0
    %338 = vmatpush2.msra.mxu0 0.0
    %339 = vmatprep.subr.mxu0 0.0
    %340 = vmatpush2.msra.mxu0 0.0
    %341 = vmatprep.subr.mxu0 0.0
    %342 = vmatpush2.msra.mxu0 0.0
    %343 = vmatprep.mubr.f32.mxu0 0.0
    %344 = vmatmul.mubr.f32.gmra.mxu0 %v196
    %v345 = vpop.f32.mrf.mxu0
    %v346 = vadd.f32 %v271, %v345
    %v347 = vpop.f32.mrf.mxu0
    %348 = vmatprep.mubr.f32.mxu0 0.0
    %349 = vmatmul.mubr.f32.gmra.mxu0 %v197
    %v350 = vpop.f32.mrf.mxu0
    %v351 = vadd.f32 %v276, %v350
    %v352 = vpop.f32.mrf.mxu0
    %353 = vdwg.mxu0
    %v354 = vtanh.pop %v346
    %v355 = vtanh.pop %v351
    %v356 = vmul.f32 %v354, %v170
    %v357 = vmul.f32 %v355, %v170
    %v358 = vsel %vm174, %v356, 0.0
    %359 = vadd.xlane.f32.xlu0 %v358
    %v360 = vpop.xlane.xlu0 %359
    %v361 = vsel %vm174, %v357, 0.0
    %362 = vadd.xlane.f32.xlu0 %v361
    %v363 = vpop.xlane.xlu0 %362
    %vm364 = vcmp.eq.s32.totalorder %v76, 1
    %v365 = vsel %vm364, %v360, 0.0
    %v366 = vsel %vm364, %v363, 0.0
    %v367 = vadd.f32 %v184, %v365
    %v368 = vadd.f32 %v185, %v366
    %369 = vset.pattern.permute.xlu0 2
    %370 = vperm.xlu0 %369, %v45
    %v371 = vpop.permute.xlu0 %370
    %372 = vset.pattern.permute.xlu0 2
    %373 = vperm.xlu0 %372, %v46
    %v374 = vpop.permute.xlu0 %373
    %vm375 = vcmp.eq.s32.totalorder %v371, %v76
    %vm376 = vcmp.eq.s32.totalorder %v374, %v76
    %v377 = vsel %vm375, 1, 0
    %v378 = vsel %vm376, 1, 0
    %v379 = vcvt.s32.f32 %v377
    %v380 = vcvt.s32.f32 %v378
    %v382 = vsel %vm174, %v354, 0
    %v385 = vsel %vm174, %v355, 0
    %387 = vmatprep.subr.mxu0 0.0
    %388 = vmatpush1.msra.mxu0 0.0
    %389 = vmatprep.subr.mxu0 0.0
    %390 = vmatpush1.msra.mxu0 0.0
    %391 = vmatprep.subr.mxu0 0.0
    %392 = vmatpush1.msra.mxu0 0.0
    %393 = vmatprep.subr.mxu0 0.0
    %394 = vmatpush1.msra.mxu0 0.0
    %395 = vmatprep.subr.mxu0 0.0
    %396 = vmatpush1.msra.mxu0 0.0
    %397 = vmatprep.subr.mxu0 0.0
    %398 = vmatpush1.msra.mxu0 0.0
    %399 = vmatprep.subr.mxu0 0.0
    %400 = vmatpush1.msra.mxu0 0.0
    %401 = vmatprep.subr.mxu0 0.0
    %402 = vmatpush1.msra.mxu0 0.0
    %403 = vmatprep.subr.mxu0 0.0
    %404 = vmatpush1.msra.mxu0 0.0
    %405 = vmatprep.subr.mxu0 0.0
    %406 = vmatpush1.msra.mxu0 0.0
    %407 = vmatprep.subr.mxu0 0.0
    %408 = vmatpush1.msra.mxu0 0.0
    %409 = vmatprep.subr.mxu0 0.0
    %410 = vmatpush1.msra.mxu0 0.0
    %411 = vmatprep.subr.mxu0 0.0
    %412 = vmatpush1.msra.mxu0 %v68
    %413 = vmatprep.subr.mxu0 0.0
    %414 = vmatpush1.msra.mxu0 %v67
    %415 = vmatprep.subr.mxu0 0.0
    %416 = vmatpush1.msra.mxu0 %v66
    %417 = vmatprep.subr.mxu0 0.0
    %418 = vmatpush1.msra.mxu0 %v65
    %419 = vmatprep.subr.mxu0 0.0
    %420 = vmatpush2.msra.mxu0 0.0
    %421 = vmatprep.subr.mxu0 0.0
    %422 = vmatpush2.msra.mxu0 0.0
    %423 = vmatprep.subr.mxu0 0.0
    %424 = vmatpush2.msra.mxu0 0.0
    %425 = vmatprep.subr.mxu0 0.0
    %426 = vmatpush2.msra.mxu0 0.0
    %427 = vmatprep.subr.mxu0 0.0
    %428 = vmatpush2.msra.mxu0 0.0
    %429 = vmatprep.subr.mxu0 0.0
    %430 = vmatpush2.msra.mxu0 0.0
    %431 = vmatprep.subr.mxu0 0.0
    %432 = vmatpush2.msra.mxu0 0.0
    %433 = vmatprep.subr.mxu0 0.0
    %434 = vmatpush2.msra.mxu0 0.0
    %435 = vmatprep.subr.mxu0 0.0
    %436 = vmatpush2.msra.mxu0 0.0
    %437 = vmatprep.subr.mxu0 0.0
    %438 = vmatpush2.msra.mxu0 0.0
    %439 = vmatprep.subr.mxu0 0.0
    %440 = vmatpush2.msra.mxu0 0.0
    %441 = vmatprep.subr.mxu0 0.0
    %442 = vmatpush2.msra.mxu0 0.0
    %443 = vmatprep.subr.mxu0 0.0
    %444 = vmatpush2.msra.mxu0 0.0
    %445 = vmatprep.subr.mxu0 0.0
    %446 = vmatpush2.msra.mxu0 0.0
    %447 = vmatprep.subr.mxu0 0.0
    %448 = vmatpush2.msra.mxu0 0.0
    %449 = vmatprep.subr.mxu0 0.0
    %450 = vmatpush2.msra.mxu0 0.0
    %451 = vmatprep.mubr.f32.mxu0 0.0
    %452 = vmatmul.mubr.f32.gmra.mxu0 %v382
    %v453 = vpop.f32.mrf.mxu0
    %v454 = vadd.f32 0.0, %v453
    %v455 = vpop.f32.mrf.mxu0
    %456 = vmatprep.mubr.f32.mxu0 0.0
    %457 = vmatmul.mubr.f32.gmra.mxu0 %v385
    %v458 = vpop.f32.mrf.mxu0
    %v459 = vadd.f32 0.0, %v458
    %v460 = vpop.f32.mrf.mxu0
    %461 = vdwg.mxu0
    %462 = vmatprep.subr.mxu0 0.0
    %463 = vmatpush1.msra.mxu0 %v64
    %464 = vmatprep.subr.mxu0 0.0
    %465 = vmatpush1.msra.mxu0 %v63
    %466 = vmatprep.subr.mxu0 0.0
    %467 = vmatpush1.msra.mxu0 %v62
    %468 = vmatprep.subr.mxu0 0.0
    %469 = vmatpush1.msra.mxu0 %v61
    %470 = vmatprep.subr.mxu0 0.0
    %471 = vmatpush1.msra.mxu0 %v60
    %472 = vmatprep.subr.mxu0 0.0
    %473 = vmatpush1.msra.mxu0 %v59
    %474 = vmatprep.subr.mxu0 0.0
    %475 = vmatpush1.msra.mxu0 %v58
    %476 = vmatprep.subr.mxu0 0.0
    %477 = vmatpush1.msra.mxu0 %v57
    %478 = vmatprep.subr.mxu0 0.0
    %479 = vmatpush1.msra.mxu0 %v56
    %480 = vmatprep.subr.mxu0 0.0
    %481 = vmatpush1.msra.mxu0 %v55
    %482 = vmatprep.subr.mxu0 0.0
    %483 = vmatpush1.msra.mxu0 %v54
    %484 = vmatprep.subr.mxu0 0.0
    %485 = vmatpush1.msra.mxu0 %v53
    %486 = vmatprep.subr.mxu0 0.0
    %487 = vmatpush1.msra.mxu0 %v52
    %488 = vmatprep.subr.mxu0 0.0
    %489 = vmatpush1.msra.mxu0 %v51
    %490 = vmatprep.subr.mxu0 0.0
    %491 = vmatpush1.msra.mxu0 %v50
    %492 = vmatprep.subr.mxu0 0.0
    %493 = vmatpush1.msra.mxu0 %v49
    %494 = vmatprep.subr.mxu0 0.0
    %495 = vmatpush2.msra.mxu0 0.0
    %496 = vmatprep.subr.mxu0 0.0
    %497 = vmatpush2.msra.mxu0 0.0
    %498 = vmatprep.subr.mxu0 0.0
    %499 = vmatpush2.msra.mxu0 0.0
    %500 = vmatprep.subr.mxu0 0.0
    %501 = vmatpush2.msra.mxu0 0.0
    %502 = vmatprep.subr.mxu0 0.0
    %503 = vmatpush2.msra.mxu0 0.0
    %504 = vmatprep.subr.mxu0 0.0
    %505 = vmatpush2.msra.mxu0 0.0
    %506 = vmatprep.subr.mxu0 0.0
    %507 = vmatpush2.msra.mxu0 0.0
    %508 = vmatprep.subr.mxu0 0.0
    %509 = vmatpush2.msra.mxu0 0.0
    %510 = vmatprep.subr.mxu0 0.0
    %511 = vmatpush2.msra.mxu0 0.0
    %512 = vmatprep.subr.mxu0 0.0
    %513 = vmatpush2.msra.mxu0 0.0
    %514 = vmatprep.subr.mxu0 0.0
    %515 = vmatpush2.msra.mxu0 0.0
    %516 = vmatprep.subr.mxu0 0.0
    %517 = vmatpush2.msra.mxu0 0.0
    %518 = vmatprep.subr.mxu0 0.0
    %519 = vmatpush2.msra.mxu0 0.0
    %520 = vmatprep.subr.mxu0 0.0
    %521 = vmatpush2.msra.mxu0 0.0
    %522 = vmatprep.subr.mxu0 0.0
    %523 = vmatpush2.msra.mxu0 0.0
    %524 = vmatprep.subr.mxu0 0.0
    %525 = vmatpush2.msra.mxu0 0.0
    %526 = vmatprep.mubr.f32.mxu0 0.0
    %527 = vmatmul.mubr.f32.gmra.mxu0 %v379
    %v528 = vpop.f32.mrf.mxu0
    %v529 = vadd.f32 %v454, %v528
    %v530 = vpop.f32.mrf.mxu0
    %531 = vmatprep.mubr.f32.mxu0 0.0
    %532 = vmatmul.mubr.f32.gmra.mxu0 %v380
    %v533 = vpop.f32.mrf.mxu0
    %v534 = vadd.f32 %v459, %v533
    %v535 = vpop.f32.mrf.mxu0
    %536 = vdwg.mxu0
    %v537 = vtanh.pop %v529
    %v538 = vtanh.pop %v534
    %v539 = vmul.f32 %v537, %v170
    %v540 = vmul.f32 %v538, %v170
    %v541 = vsel %vm174, %v539, 0.0
    %542 = vadd.xlane.f32.xlu0 %v541
    %v543 = vpop.xlane.xlu0 %542
    %v544 = vsel %vm174, %v540, 0.0
    %545 = vadd.xlane.f32.xlu0 %v544
    %v546 = vpop.xlane.xlu0 %545
    %vm547 = vcmp.eq.s32.totalorder %v76, 2
    %v548 = vsel %vm547, %v543, 0.0
    %v549 = vsel %vm547, %v546, 0.0
    %v550 = vadd.f32 %v367, %v548
    %v551 = vadd.f32 %v368, %v549
    %552 = vset.pattern.permute.xlu0 3
    %553 = vperm.xlu0 %552, %v45
    %v554 = vpop.permute.xlu0 %553
    %555 = vset.pattern.permute.xlu0 3
    %556 = vperm.xlu0 %555, %v46
    %v557 = vpop.permute.xlu0 %556
    %vm558 = vcmp.eq.s32.totalorder %v554, %v76
    %vm559 = vcmp.eq.s32.totalorder %v557, %v76
    %v560 = vsel %vm558, 1, 0
    %v561 = vsel %vm559, 1, 0
    %v562 = vcvt.s32.f32 %v560
    %v563 = vcvt.s32.f32 %v561
    %v565 = vsel %vm174, %v537, 0
    %v568 = vsel %vm174, %v538, 0
    %570 = vmatprep.subr.mxu0 0.0
    %571 = vmatpush1.msra.mxu0 0.0
    %572 = vmatprep.subr.mxu0 0.0
    %573 = vmatpush1.msra.mxu0 0.0
    %574 = vmatprep.subr.mxu0 0.0
    %575 = vmatpush1.msra.mxu0 0.0
    %576 = vmatprep.subr.mxu0 0.0
    %577 = vmatpush1.msra.mxu0 0.0
    %578 = vmatprep.subr.mxu0 0.0
    %579 = vmatpush1.msra.mxu0 0.0
    %580 = vmatprep.subr.mxu0 0.0
    %581 = vmatpush1.msra.mxu0 0.0
    %582 = vmatprep.subr.mxu0 0.0
    %583 = vmatpush1.msra.mxu0 0.0
    %584 = vmatprep.subr.mxu0 0.0
    %585 = vmatpush1.msra.mxu0 0.0
    %586 = vmatprep.subr.mxu0 0.0
    %587 = vmatpush1.msra.mxu0 0.0
    %588 = vmatprep.subr.mxu0 0.0
    %589 = vmatpush1.msra.mxu0 0.0
    %590 = vmatprep.subr.mxu0 0.0
    %591 = vmatpush1.msra.mxu0 0.0
    %592 = vmatprep.subr.mxu0 0.0
    %593 = vmatpush1.msra.mxu0 0.0
    %594 = vmatprep.subr.mxu0 0.0
    %595 = vmatpush1.msra.mxu0 %v68
    %596 = vmatprep.subr.mxu0 0.0
    %597 = vmatpush1.msra.mxu0 %v67
    %598 = vmatprep.subr.mxu0 0.0
    %599 = vmatpush1.msra.mxu0 %v66
    %600 = vmatprep.subr.mxu0 0.0
    %601 = vmatpush1.msra.mxu0 %v65
    %602 = vmatprep.subr.mxu0 0.0
    %603 = vmatpush2.msra.mxu0 0.0
    %604 = vmatprep.subr.mxu0 0.0
    %605 = vmatpush2.msra.mxu0 0.0
    %606 = vmatprep.subr.mxu0 0.0
    %607 = vmatpush2.msra.mxu0 0.0
    %608 = vmatprep.subr.mxu0 0.0
    %609 = vmatpush2.msra.mxu0 0.0
    %610 = vmatprep.subr.mxu0 0.0
    %611 = vmatpush2.msra.mxu0 0.0
    %612 = vmatprep.subr.mxu0 0.0
    %613 = vmatpush2.msra.mxu0 0.0
    %614 = vmatprep.subr.mxu0 0.0
    %615 = vmatpush2.msra.mxu0 0.0
    %616 = vmatprep.subr.mxu0 0.0
    %617 = vmatpush2.msra.mxu0 0.0
    %618 = vmatprep.subr.mxu0 0.0
    %619 = vmatpush2.msra.mxu0 0.0
    %620 = vmatprep.subr.mxu0 0.0
    %621 = vmatpush2.msra.mxu0 0.0
    %622 = vmatprep.subr.mxu0 0.0
    %623 = vmatpush2.msra.mxu0 0.0
    %624 = vmatprep.subr.mxu0 0.0
    %625 = vmatpush2.msra.mxu0 0.0
    %626 = vmatprep.subr.mxu0 0.0
    %627 = vmatpush2.msra.mxu0 0.0
    %628 = vmatprep.subr.mxu0 0.0
    %629 = vmatpush2.msra.mxu0 0.0
    %630 = vmatprep.subr.mxu0 0.0
    %631 = vmatpush2.msra.mxu0 0.0
    %632 = vmatprep.subr.mxu0 0.0
    %633 = vmatpush2.msra.mxu0 0.0
    %634 = vmatprep.mubr.f32.mxu0 0.0
    %635 = vmatmul.mubr.f32.gmra.mxu0 %v565
    %v636 = vpop.f32.mrf.mxu0
    %v637 = vadd.f32 0.0, %v636
    %v638 = vpop.f32.mrf.mxu0
    %639 = vmatprep.mubr.f32.mxu0 0.0
    %640 = vmatmul.mubr.f32.gmra.mxu0 %v568
    %v641 = vpop.f32.mrf.mxu0
    %v642 = vadd.f32 0.0, %v641
    %v643 = vpop.f32.mrf.mxu0
    %644 = vdwg.mxu0
    %645 = vmatprep.subr.mxu0 0.0
    %646 = vmatpush1.msra.mxu0 %v64
    %647 = vmatprep.subr.mxu0 0.0
    %648 = vmatpush1.msra.mxu0 %v63
    %649 = vmatprep.subr.mxu0 0.0
    %650 = vmatpush1.msra.mxu0 %v62
    %651 = vmatprep.subr.mxu0 0.0
    %652 = vmatpush1.msra.mxu0 %v61
    %653 = vmatprep.subr.mxu0 0.0
    %654 = vmatpush1.msra.mxu0 %v60
    %655 = vmatprep.subr.mxu0 0.0
    %656 = vmatpush1.msra.mxu0 %v59
    %657 = vmatprep.subr.mxu0 0.0
    %658 = vmatpush1.msra.mxu0 %v58
    %659 = vmatprep.subr.mxu0 0.0
    %660 = vmatpush1.msra.mxu0 %v57
    %661 = vmatprep.subr.mxu0 0.0
    %662 = vmatpush1.msra.mxu0 %v56
    %663 = vmatprep.subr.mxu0 0.0
    %664 = vmatpush1.msra.mxu0 %v55
    %665 = vmatprep.subr.mxu0 0.0
    %666 = vmatpush1.msra.mxu0 %v54
    %667 = vmatprep.subr.mxu0 0.0
    %668 = vmatpush1.msra.mxu0 %v53
    %669 = vmatprep.subr.mxu0 0.0
    %670 = vmatpush1.msra.mxu0 %v52
    %671 = vmatprep.subr.mxu0 0.0
    %672 = vmatpush1.msra.mxu0 %v51
    %673 = vmatprep.subr.mxu0 0.0
    %674 = vmatpush1.msra.mxu0 %v50
    %675 = vmatprep.subr.mxu0 0.0
    %676 = vmatpush1.msra.mxu0 %v49
    %677 = vmatprep.subr.mxu0 0.0
    %678 = vmatpush2.msra.mxu0 0.0
    %679 = vmatprep.subr.mxu0 0.0
    %680 = vmatpush2.msra.mxu0 0.0
    %681 = vmatprep.subr.mxu0 0.0
    %682 = vmatpush2.msra.mxu0 0.0
    %683 = vmatprep.subr.mxu0 0.0
    %684 = vmatpush2.msra.mxu0 0.0
    %685 = vmatprep.subr.mxu0 0.0
    %686 = vmatpush2.msra.mxu0 0.0
    %687 = vmatprep.subr.mxu0 0.0
    %688 = vmatpush2.msra.mxu0 0.0
    %689 = vmatprep.subr.mxu0 0.0
    %690 = vmatpush2.msra.mxu0 0.0
    %691 = vmatprep.subr.mxu0 0.0
    %692 = vmatpush2.msra.mxu0 0.0
    %693 = vmatprep.subr.mxu0 0.0
    %694 = vmatpush2.msra.mxu0 0.0
    %695 = vmatprep.subr.mxu0 0.0
    %696 = vmatpush2.msra.mxu0 0.0
    %697 = vmatprep.subr.mxu0 0.0
    %698 = vmatpush2.msra.mxu0 0.0
    %699 = vmatprep.subr.mxu0 0.0
    %700 = vmatpush2.msra.mxu0 0.0
    %701 = vmatprep.subr.mxu0 0.0
    %702 = vmatpush2.msra.mxu0 0.0
    %703 = vmatprep.subr.mxu0 0.0
    %704 = vmatpush2.msra.mxu0 0.0
    %705 = vmatprep.subr.mxu0 0.0
    %706 = vmatpush2.msra.mxu0 0.0
    %707 = vmatprep.subr.mxu0 0.0
    %708 = vmatpush2.msra.mxu0 0.0
    %709 = vmatprep.mubr.f32.mxu0 0.0
    %710 = vmatmul.mubr.f32.gmra.mxu0 %v562
    %v711 = vpop.f32.mrf.mxu0
    %v712 = vadd.f32 %v637, %v711
    %v713 = vpop.f32.mrf.mxu0
    %714 = vmatprep.mubr.f32.mxu0 0.0
    %715 = vmatmul.mubr.f32.gmra.mxu0 %v563
    %v716 = vpop.f32.mrf.mxu0
    %v717 = vadd.f32 %v642, %v716
    %v718 = vpop.f32.mrf.mxu0
    %719 = vdwg.mxu0
    %v720 = vtanh.pop %v712
    %v721 = vtanh.pop %v717
    %v722 = vmul.f32 %v720, %v170
    %v723 = vmul.f32 %v721, %v170
    %v724 = vsel %vm174, %v722, 0.0
    %725 = vadd.xlane.f32.xlu0 %v724
    %v726 = vpop.xlane.xlu0 %725
    %v727 = vsel %vm174, %v723, 0.0
    %728 = vadd.xlane.f32.xlu0 %v727
    %v729 = vpop.xlane.xlu0 %728
    %vm730 = vcmp.eq.s32.totalorder %v76, 3
    %v731 = vsel %vm730, %v726, 0.0
    %v732 = vsel %vm730, %v729, 0.0
    %v733 = vadd.f32 %v550, %v731
    %v734 = vadd.f32 %v551, %v732
    %735 = vset.pattern.permute.xlu0 4
    %736 = vperm.xlu0 %735, %v45
    %v737 = vpop.permute.xlu0 %736
    %738 = vset.pattern.permute.xlu0 4
    %739 = vperm.xlu0 %738, %v46
    %v740 = vpop.permute.xlu0 %739
    %vm741 = vcmp.eq.s32.totalorder %v737, %v76
    %vm742 = vcmp.eq.s32.totalorder %v740, %v76
    %v743 = vsel %vm741, 1, 0
    %v744 = vsel %vm742, 1, 0
    %v745 = vcvt.s32.f32 %v743
    %v746 = vcvt.s32.f32 %v744
    %v748 = vsel %vm174, %v720, 0
    %v751 = vsel %vm174, %v721, 0
    %753 = vmatprep.subr.mxu0 0.0
    %754 = vmatpush1.msra.mxu0 0.0
    %755 = vmatprep.subr.mxu0 0.0
    %756 = vmatpush1.msra.mxu0 0.0
    %757 = vmatprep.subr.mxu0 0.0
    %758 = vmatpush1.msra.mxu0 0.0
    %759 = vmatprep.subr.mxu0 0.0
    %760 = vmatpush1.msra.mxu0 0.0
    %761 = vmatprep.subr.mxu0 0.0
    %762 = vmatpush1.msra.mxu0 0.0
    %763 = vmatprep.subr.mxu0 0.0
    %764 = vmatpush1.msra.mxu0 0.0
    %765 = vmatprep.subr.mxu0 0.0
    %766 = vmatpush1.msra.mxu0 0.0
    %767 = vmatprep.subr.mxu0 0.0
    %768 = vmatpush1.msra.mxu0 0.0
    %769 = vmatprep.subr.mxu0 0.0
    %770 = vmatpush1.msra.mxu0 0.0
    %771 = vmatprep.subr.mxu0 0.0
    %772 = vmatpush1.msra.mxu0 0.0
    %773 = vmatprep.subr.mxu0 0.0
    %774 = vmatpush1.msra.mxu0 0.0
    %775 = vmatprep.subr.mxu0 0.0
    %776 = vmatpush1.msra.mxu0 0.0
    %777 = vmatprep.subr.mxu0 0.0
    %778 = vmatpush1.msra.mxu0 %v68
    %779 = vmatprep.subr.mxu0 0.0
    %780 = vmatpush1.msra.mxu0 %v67
    %781 = vmatprep.subr.mxu0 0.0
    %782 = vmatpush1.msra.mxu0 %v66
    %783 = vmatprep.subr.mxu0 0.0
    %784 = vmatpush1.msra.mxu0 %v65
    %785 = vmatprep.subr.mxu0 0.0
    %786 = vmatpush2.msra.mxu0 0.0
    %787 = vmatprep.subr.mxu0 0.0
    %788 = vmatpush2.msra.mxu0 0.0
    %789 = vmatprep.subr.mxu0 0.0
    %790 = vmatpush2.msra.mxu0 0.0
    %791 = vmatprep.subr.mxu0 0.0
    %792 = vmatpush2.msra.mxu0 0.0
    %793 = vmatprep.subr.mxu0 0.0
    %794 = vmatpush2.msra.mxu0 0.0
    %795 = vmatprep.subr.mxu0 0.0
    %796 = vmatpush2.msra.mxu0 0.0
    %797 = vmatprep.subr.mxu0 0.0
    %798 = vmatpush2.msra.mxu0 0.0
    %799 = vmatprep.subr.mxu0 0.0
    %800 = vmatpush2.msra.mxu0 0.0
    %801 = vmatprep.subr.mxu0 0.0
    %802 = vmatpush2.msra.mxu0 0.0
    %803 = vmatprep.subr.mxu0 0.0
    %804 = vmatpush2.msra.mxu0 0.0
    %805 = vmatprep.subr.mxu0 0.0
    %806 = vmatpush2.msra.mxu0 0.0
    %807 = vmatprep.subr.mxu0 0.0
    %808 = vmatpush2.msra.mxu0 0.0
    %809 = vmatprep.subr.mxu0 0.0
    %810 = vmatpush2.msra.mxu0 0.0
    %811 = vmatprep.subr.mxu0 0.0
    %812 = vmatpush2.msra.mxu0 0.0
    %813 = vmatprep.subr.mxu0 0.0
    %814 = vmatpush2.msra.mxu0 0.0
    %815 = vmatprep.subr.mxu0 0.0
    %816 = vmatpush2.msra.mxu0 0.0
    %817 = vmatprep.mubr.f32.mxu0 0.0
    %818 = vmatmul.mubr.f32.gmra.mxu0 %v748
    %v819 = vpop.f32.mrf.mxu0
    %v820 = vadd.f32 0.0, %v819
    %v821 = vpop.f32.mrf.mxu0
    %822 = vmatprep.mubr.f32.mxu0 0.0
    %823 = vmatmul.mubr.f32.gmra.mxu0 %v751
    %v824 = vpop.f32.mrf.mxu0
    %v825 = vadd.f32 0.0, %v824
    %v826 = vpop.f32.mrf.mxu0
    %827 = vdwg.mxu0
    %828 = vmatprep.subr.mxu0 0.0
    %829 = vmatpush1.msra.mxu0 %v64
    %830 = vmatprep.subr.mxu0 0.0
    %831 = vmatpush1.msra.mxu0 %v63
    %832 = vmatprep.subr.mxu0 0.0
    %833 = vmatpush1.msra.mxu0 %v62
    %834 = vmatprep.subr.mxu0 0.0
    %835 = vmatpush1.msra.mxu0 %v61
    %836 = vmatprep.subr.mxu0 0.0
    %837 = vmatpush1.msra.mxu0 %v60
    %838 = vmatprep.subr.mxu0 0.0
    %839 = vmatpush1.msra.mxu0 %v59
    %840 = vmatprep.subr.mxu0 0.0
    %841 = vmatpush1.msra.mxu0 %v58
    %842 = vmatprep.subr.mxu0 0.0
    %843 = vmatpush1.msra.mxu0 %v57
    %844 = vmatprep.subr.mxu0 0.0
    %845 = vmatpush1.msra.mxu0 %v56
    %846 = vmatprep.subr.mxu0 0.0
    %847 = vmatpush1.msra.mxu0 %v55
    %848 = vmatprep.subr.mxu0 0.0
    %849 = vmatpush1.msra.mxu0 %v54
    %850 = vmatprep.subr.mxu0 0.0
    %851 = vmatpush1.msra.mxu0 %v53
    %852 = vmatprep.subr.mxu0 0.0
    %853 = vmatpush1.msra.mxu0 %v52
    %854 = vmatprep.subr.mxu0 0.0
    %855 = vmatpush1.msra.mxu0 %v51
    %856 = vmatprep.subr.mxu0 0.0
    %857 = vmatpush1.msra.mxu0 %v50
    %858 = vmatprep.subr.mxu0 0.0
    %859 = vmatpush1.msra.mxu0 %v49
    %860 = vmatprep.subr.mxu0 0.0
    %861 = vmatpush2.msra.mxu0 0.0
    %862 = vmatprep.subr.mxu0 0.0
    %863 = vmatpush2.msra.mxu0 0.0
    %864 = vmatprep.subr.mxu0 0.0
    %865 = vmatpush2.msra.mxu0 0.0
    %866 = vmatprep.subr.mxu0 0.0
    %867 = vmatpush2.msra.mxu0 0.0
    %868 = vmatprep.subr.mxu0 0.0
    %869 = vmatpush2.msra.mxu0 0.0
    %870 = vmatprep.subr.mxu0 0.0
    %871 = vmatpush2.msra.mxu0 0.0
    %872 = vmatprep.subr.mxu0 0.0
    %873 = vmatpush2.msra.mxu0 0.0
    %874 = vmatprep.subr.mxu0 0.0
    %875 = vmatpush2.msra.mxu0 0.0
    %876 = vmatprep.subr.mxu0 0.0
    %877 = vmatpush2.msra.mxu0 0.0
    %878 = vmatprep.subr.mxu0 0.0
    %879 = vmatpush2.msra.mxu0 0.0
    %880 = vmatprep.subr.mxu0 0.0
    %881 = vmatpush2.msra.mxu0 0.0
    %882 = vmatprep.subr.mxu0 0.0
    %883 = vmatpush2.msra.mxu0 0.0
    %884 = vmatprep.subr.mxu0 0.0
    %885 = vmatpush2.msra.mxu0 0.0
    %886 = vmatprep.subr.mxu0 0.0
    %887 = vmatpush2.msra.mxu0 0.0
    %888 = vmatprep.subr.mxu0 0.0
    %889 = vmatpush2.msra.mxu0 0.0
    %890 = vmatprep.subr.mxu0 0.0
    %891 = vmatpush2.msra.mxu0 0.0
    %892 = vmatprep.mubr.f32.mxu0 0.0
    %893 = vmatmul.mubr.f32.gmra.mxu0 %v745
    %v894 = vpop.f32.mrf.mxu0
    %v895 = vadd.f32 %v820, %v894
    %v896 = vpop.f32.mrf.mxu0
    %897 = vmatprep.mubr.f32.mxu0 0.0
    %898 = vmatmul.mubr.f32.gmra.mxu0 %v746
    %v899 = vpop.f32.mrf.mxu0
    %v900 = vadd.f32 %v825, %v899
    %v901 = vpop.f32.mrf.mxu0
    %902 = vdwg.mxu0
    %v903 = vtanh.pop %v895
    %v904 = vtanh.pop %v900
    %v905 = vmul.f32 %v903, %v170
    %v906 = vmul.f32 %v904, %v170
    %v907 = vsel %vm174, %v905, 0.0
    %908 = vadd.xlane.f32.xlu0 %v907
    %v909 = vpop.xlane.xlu0 %908
    %v910 = vsel %vm174, %v906, 0.0
    %911 = vadd.xlane.f32.xlu0 %v910
    %v912 = vpop.xlane.xlu0 %911
    %vm913 = vcmp.eq.s32.totalorder %v76, 4
    %v914 = vsel %vm913, %v909, 0.0
    %v915 = vsel %vm913, %v912, 0.0
    %v916 = vadd.f32 %v733, %v914
    %v917 = vadd.f32 %v734, %v915
    %918 = vset.pattern.permute.xlu0 5
    %919 = vperm.xlu0 %918, %v45
    %v920 = vpop.permute.xlu0 %919
    %921 = vset.pattern.permute.xlu0 5
    %922 = vperm.xlu0 %921, %v46
    %v923 = vpop.permute.xlu0 %922
    %vm924 = vcmp.eq.s32.totalorder %v920, %v76
    %vm925 = vcmp.eq.s32.totalorder %v923, %v76
    %v926 = vsel %vm924, 1, 0
    %v927 = vsel %vm925, 1, 0
    %v928 = vcvt.s32.f32 %v926
    %v929 = vcvt.s32.f32 %v927
    %v931 = vsel %vm174, %v903, 0
    %v934 = vsel %vm174, %v904, 0
    %936 = vmatprep.subr.mxu0 0.0
    %937 = vmatpush1.msra.mxu0 0.0
    %938 = vmatprep.subr.mxu0 0.0
    %939 = vmatpush1.msra.mxu0 0.0
    %940 = vmatprep.subr.mxu0 0.0
    %941 = vmatpush1.msra.mxu0 0.0
    %942 = vmatprep.subr.mxu0 0.0
    %943 = vmatpush1.msra.mxu0 0.0
    %944 = vmatprep.subr.mxu0 0.0
    %945 = vmatpush1.msra.mxu0 0.0
    %946 = vmatprep.subr.mxu0 0.0
    %947 = vmatpush1.msra.mxu0 0.0
    %948 = vmatprep.subr.mxu0 0.0
    %949 = vmatpush1.msra.mxu0 0.0
    %950 = vmatprep.subr.mxu0 0.0
    %951 = vmatpush1.msra.mxu0 0.0
    %952 = vmatprep.subr.mxu0 0.0
    %953 = vmatpush1.msra.mxu0 0.0
    %954 = vmatprep.subr.mxu0 0.0
    %955 = vmatpush1.msra.mxu0 0.0
    %956 = vmatprep.subr.mxu0 0.0
    %957 = vmatpush1.msra.mxu0 0.0
    %958 = vmatprep.subr.mxu0 0.0
    %959 = vmatpush1.msra.mxu0 0.0
    %960 = vmatprep.subr.mxu0 0.0
    %961 = vmatpush1.msra.mxu0 %v68
    %962 = vmatprep.subr.mxu0 0.0
    %963 = vmatpush1.msra.mxu0 %v67
    %964 = vmatprep.subr.mxu0 0.0
    %965 = vmatpush1.msra.mxu0 %v66
    %966 = vmatprep.subr.mxu0 0.0
    %967 = vmatpush1.msra.mxu0 %v65
    %968 = vmatprep.subr.mxu0 0.0
    %969 = vmatpush2.msra.mxu0 0.0
    %970 = vmatprep.subr.mxu0 0.0
    %971 = vmatpush2.msra.mxu0 0.0
    %972 = vmatprep.subr.mxu0 0.0
    %973 = vmatpush2.msra.mxu0 0.0
    %974 = vmatprep.subr.mxu0 0.0
    %975 = vmatpush2.msra.mxu0 0.0
    %976 = vmatprep.subr.mxu0 0.0
    %977 = vmatpush2.msra.mxu0 0.0
    %978 = vmatprep.subr.mxu0 0.0
    %979 = vmatpush2.msra.mxu0 0.0
    %980 = vmatprep.subr.mxu0 0.0
    %981 = vmatpush2.msra.mxu0 0.0
    %982 = vmatprep.subr.mxu0 0.0
    %983 = vmatpush2.msra.mxu0 0.0
    %984 = vmatprep.subr.mxu0 0.0
    %985 = vmatpush2.msra.mxu0 0.0
    %986 = vmatprep.subr.mxu0 0.0
    %987 = vmatpush2.msra.mxu0 0.0
    %988 = vmatprep.subr.mxu0 0.0
    %989 = vmatpush2.msra.mxu0 0.0
    %990 = vmatprep.subr.mxu0 0.0
    %991 = vmatpush2.msra.mxu0 0.0
    %992 = vmatprep.subr.mxu0 0.0
    %993 = vmatpush2.msra.mxu0 0.0
    %994 = vmatprep.subr.mxu0 0.0
    %995 = vmatpush2.msra.mxu0 0.0
    %996 = vmatprep.subr.mxu0 0.0
    %997 = vmatpush2.msra.mxu0 0.0
    %998 = vmatprep.subr.mxu0 0.0
    %999 = vmatpush2.msra.mxu0 0.0
    %1000 = vmatprep.mubr.f32.mxu0 0.0
    %1001 = vmatmul.mubr.f32.gmra.mxu0 %v931
    %v1002 = vpop.f32.mrf.mxu0
    %v1003 = vadd.f32 0.0, %v1002
    %v1004 = vpop.f32.mrf.mxu0
    %1005 = vmatprep.mubr.f32.mxu0 0.0
    %1006 = vmatmul.mubr.f32.gmra.mxu0 %v934
    %v1007 = vpop.f32.mrf.mxu0
    %v1008 = vadd.f32 0.0, %v1007
    %v1009 = vpop.f32.mrf.mxu0
    %1010 = vdwg.mxu0
    %1011 = vmatprep.subr.mxu0 0.0
    %1012 = vmatpush1.msra.mxu0 %v64
    %1013 = vmatprep.subr.mxu0 0.0
    %1014 = vmatpush1.msra.mxu0 %v63
    %1015 = vmatprep.subr.mxu0 0.0
    %1016 = vmatpush1.msra.mxu0 %v62
    %1017 = vmatprep.subr.mxu0 0.0
    %1018 = vmatpush1.msra.mxu0 %v61
    %1019 = vmatprep.subr.mxu0 0.0
    %1020 = vmatpush1.msra.mxu0 %v60
    %1021 = vmatprep.subr.mxu0 0.0
    %1022 = vmatpush1.msra.mxu0 %v59
    %1023 = vmatprep.subr.mxu0 0.0
    %1024 = vmatpush1.msra.mxu0 %v58
    %1025 = vmatprep.subr.mxu0 0.0
    %1026 = vmatpush1.msra.mxu0 %v57
    %1027 = vmatprep.subr.mxu0 0.0
    %1028 = vmatpush1.msra.mxu0 %v56
    %1029 = vmatprep.subr.mxu0 0.0
    %1030 = vmatpush1.msra.mxu0 %v55
    %1031 = vmatprep.subr.mxu0 0.0
    %1032 = vmatpush1.msra.mxu0 %v54
    %1033 = vmatprep.subr.mxu0 0.0
    %1034 = vmatpush1.msra.mxu0 %v53
    %1035 = vmatprep.subr.mxu0 0.0
    %1036 = vmatpush1.msra.mxu0 %v52
    %1037 = vmatprep.subr.mxu0 0.0
    %1038 = vmatpush1.msra.mxu0 %v51
    %1039 = vmatprep.subr.mxu0 0.0
    %1040 = vmatpush1.msra.mxu0 %v50
    %1041 = vmatprep.subr.mxu0 0.0
    %1042 = vmatpush1.msra.mxu0 %v49
    %1043 = vmatprep.subr.mxu0 0.0
    %1044 = vmatpush2.msra.mxu0 0.0
    %1045 = vmatprep.subr.mxu0 0.0
    %1046 = vmatpush2.msra.mxu0 0.0
    %1047 = vmatprep.subr.mxu0 0.0
    %1048 = vmatpush2.msra.mxu0 0.0
    %1049 = vmatprep.subr.mxu0 0.0
    %1050 = vmatpush2.msra.mxu0 0.0
    %1051 = vmatprep.subr.mxu0 0.0
    %1052 = vmatpush2.msra.mxu0 0.0
    %1053 = vmatprep.subr.mxu0 0.0
    %1054 = vmatpush2.msra.mxu0 0.0
    %1055 = vmatprep.subr.mxu0 0.0
    %1056 = vmatpush2.msra.mxu0 0.0
    %1057 = vmatprep.subr.mxu0 0.0
    %1058 = vmatpush2.msra.mxu0 0.0
    %1059 = vmatprep.subr.mxu0 0.0
    %1060 = vmatpush2.msra.mxu0 0.0
    %1061 = vmatprep.subr.mxu0 0.0
    %1062 = vmatpush2.msra.mxu0 0.0
    %1063 = vmatprep.subr.mxu0 0.0
    %1064 = vmatpush2.msra.mxu0 0.0
    %1065 = vmatprep.subr.mxu0 0.0
    %1066 = vmatpush2.msra.mxu0 0.0
    %1067 = vmatprep.subr.mxu0 0.0
    %1068 = vmatpush2.msra.mxu0 0.0
    %1069 = vmatprep.subr.mxu0 0.0
    %1070 = vmatpush2.msra.mxu0 0.0
    %1071 = vmatprep.subr.mxu0 0.0
    %1072 = vmatpush2.msra.mxu0 0.0
    %1073 = vmatprep.subr.mxu0 0.0
    %1074 = vmatpush2.msra.mxu0 0.0
    %1075 = vmatprep.mubr.f32.mxu0 0.0
    %1076 = vmatmul.mubr.f32.gmra.mxu0 %v928
    %v1077 = vpop.f32.mrf.mxu0
    %v1078 = vadd.f32 %v1003, %v1077
    %v1079 = vpop.f32.mrf.mxu0
    %1080 = vmatprep.mubr.f32.mxu0 0.0
    %1081 = vmatmul.mubr.f32.gmra.mxu0 %v929
    %v1082 = vpop.f32.mrf.mxu0
    %v1083 = vadd.f32 %v1008, %v1082
    %v1084 = vpop.f32.mrf.mxu0
    %1085 = vdwg.mxu0
    %v1086 = vtanh.pop %v1078
    %v1087 = vtanh.pop %v1083
    %v1088 = vmul.f32 %v1086, %v170
    %v1089 = vmul.f32 %v1087, %v170
    %v1090 = vsel %vm174, %v1088, 0.0
    %1091 = vadd.xlane.f32.xlu0 %v1090
    %v1092 = vpop.xlane.xlu0 %1091
    %v1093 = vsel %vm174, %v1089, 0.0
    %1094 = vadd.xlane.f32.xlu0 %v1093
    %v1095 = vpop.xlane.xlu0 %1094
    %vm1096 = vcmp.eq.s32.totalorder %v76, 5
    %v1097 = vsel %vm1096, %v1092, 0.0
    %v1098 = vsel %vm1096, %v1095, 0.0
    %v1099 = vadd.f32 %v916, %v1097
    %v1100 = vadd.f32 %v917, %v1098
    %1101 = vset.pattern.permute.xlu0 6
    %1102 = vperm.xlu0 %1101, %v45
    %v1103 = vpop.permute.xlu0 %1102
    %1104 = vset.pattern.permute.xlu0 6
    %1105 = vperm.xlu0 %1104, %v46
    %v1106 = vpop.permute.xlu0 %1105
    %vm1107 = vcmp.eq.s32.totalorder %v1103, %v76
    %vm1108 = vcmp.eq.s32.totalorder %v1106, %v76
    %v1109 = vsel %vm1107, 1, 0
    %v1110 = vsel %vm1108, 1, 0
    %v1111 = vcvt.s32.f32 %v1109
    %v1112 = vcvt.s32.f32 %v1110
    %v1114 = vsel %vm174, %v1086, 0
    %v1117 = vsel %vm174, %v1087, 0
    %1119 = vmatprep.subr.mxu0 0.0
    %1120 = vmatpush1.msra.mxu0 0.0
    %1121 = vmatprep.subr.mxu0 0.0
    %1122 = vmatpush1.msra.mxu0 0.0
    %1123 = vmatprep.subr.mxu0 0.0
    %1124 = vmatpush1.msra.mxu0 0.0
    %1125 = vmatprep.subr.mxu0 0.0
    %1126 = vmatpush1.msra.mxu0 0.0
    %1127 = vmatprep.subr.mxu0 0.0
    %1128 = vmatpush1.msra.mxu0 0.0
    %1129 = vmatprep.subr.mxu0 0.0
    %1130 = vmatpush1.msra.mxu0 0.0
    %1131 = vmatprep.subr.mxu0 0.0
    %1132 = vmatpush1.msra.mxu0 0.0
    %1133 = vmatprep.subr.mxu0 0.0
    %1134 = vmatpush1.msra.mxu0 0.0
    %1135 = vmatprep.subr.mxu0 0.0
    %1136 = vmatpush1.msra.mxu0 0.0
    %1137 = vmatprep.subr.mxu0 0.0
    %1138 = vmatpush1.msra.mxu0 0.0
    %1139 = vmatprep.subr.mxu0 0.0
    %1140 = vmatpush1.msra.mxu0 0.0
    %1141 = vmatprep.subr.mxu0 0.0
    %1142 = vmatpush1.msra.mxu0 0.0
    %1143 = vmatprep.subr.mxu0 0.0
    %1144 = vmatpush1.msra.mxu0 %v68
    %1145 = vmatprep.subr.mxu0 0.0
    %1146 = vmatpush1.msra.mxu0 %v67
    %1147 = vmatprep.subr.mxu0 0.0
    %1148 = vmatpush1.msra.mxu0 %v66
    %1149 = vmatprep.subr.mxu0 0.0
    %1150 = vmatpush1.msra.mxu0 %v65
    %1151 = vmatprep.subr.mxu0 0.0
    %1152 = vmatpush2.msra.mxu0 0.0
    %1153 = vmatprep.subr.mxu0 0.0
    %1154 = vmatpush2.msra.mxu0 0.0
    %1155 = vmatprep.subr.mxu0 0.0
    %1156 = vmatpush2.msra.mxu0 0.0
    %1157 = vmatprep.subr.mxu0 0.0
    %1158 = vmatpush2.msra.mxu0 0.0
    %1159 = vmatprep.subr.mxu0 0.0
    %1160 = vmatpush2.msra.mxu0 0.0
    %1161 = vmatprep.subr.mxu0 0.0
    %1162 = vmatpush2.msra.mxu0 0.0
    %1163 = vmatprep.subr.mxu0 0.0
    %1164 = vmatpush2.msra.mxu0 0.0
    %1165 = vmatprep.subr.mxu0 0.0
    %1166 = vmatpush2.msra.mxu0 0.0
    %1167 = vmatprep.subr.mxu0 0.0
    %1168 = vmatpush2.msra.mxu0 0.0
    %1169 = vmatprep.subr.mxu0 0.0
    %1170 = vmatpush2.msra.mxu0 0.0
    %1171 = vmatprep.subr.mxu0 0.0
    %1172 = vmatpush2.msra.mxu0 0.0
    %1173 = vmatprep.subr.mxu0 0.0
    %1174 = vmatpush2.msra.mxu0 0.0
    %1175 = vmatprep.subr.mxu0 0.0
    %1176 = vmatpush2.msra.mxu0 0.0
    %1177 = vmatprep.subr.mxu0 0.0
    %1178 = vmatpush2.msra.mxu0 0.0
    %1179 = vmatprep.subr.mxu0 0.0
    %1180 = vmatpush2.msra.mxu0 0.0
    %1181 = vmatprep.subr.mxu0 0.0
    %1182 = vmatpush2.msra.mxu0 0.0
    %1183 = vmatprep.mubr.f32.mxu0 0.0
    %1184 = vmatmul.mubr.f32.gmra.mxu0 %v1114
    %v1185 = vpop.f32.mrf.mxu0
    %v1186 = vadd.f32 0.0, %v1185
    %v1187 = vpop.f32.mrf.mxu0
    %1188 = vmatprep.mubr.f32.mxu0 0.0
    %1189 = vmatmul.mubr.f32.gmra.mxu0 %v1117
    %v1190 = vpop.f32.mrf.mxu0
    %v1191 = vadd.f32 0.0, %v1190
    %v1192 = vpop.f32.mrf.mxu0
    %1193 = vdwg.mxu0
    %1194 = vmatprep.subr.mxu0 0.0
    %1195 = vmatpush1.msra.mxu0 %v64
    %1196 = vmatprep.subr.mxu0 0.0
    %1197 = vmatpush1.msra.mxu0 %v63
    %1198 = vmatprep.subr.mxu0 0.0
    %1199 = vmatpush1.msra.mxu0 %v62
    %1200 = vmatprep.subr.mxu0 0.0
    %1201 = vmatpush1.msra.mxu0 %v61
    %1202 = vmatprep.subr.mxu0 0.0
    %1203 = vmatpush1.msra.mxu0 %v60
    %1204 = vmatprep.subr.mxu0 0.0
    %1205 = vmatpush1.msra.mxu0 %v59
    %1206 = vmatprep.subr.mxu0 0.0
    %1207 = vmatpush1.msra.mxu0 %v58
    %1208 = vmatprep.subr.mxu0 0.0
    %1209 = vmatpush1.msra.mxu0 %v57
    %1210 = vmatprep.subr.mxu0 0.0
    %1211 = vmatpush1.msra.mxu0 %v56
    %1212 = vmatprep.subr.mxu0 0.0
    %1213 = vmatpush1.msra.mxu0 %v55
    %1214 = vmatprep.subr.mxu0 0.0
    %1215 = vmatpush1.msra.mxu0 %v54
    %1216 = vmatprep.subr.mxu0 0.0
    %1217 = vmatpush1.msra.mxu0 %v53
    %1218 = vmatprep.subr.mxu0 0.0
    %1219 = vmatpush1.msra.mxu0 %v52
    %1220 = vmatprep.subr.mxu0 0.0
    %1221 = vmatpush1.msra.mxu0 %v51
    %1222 = vmatprep.subr.mxu0 0.0
    %1223 = vmatpush1.msra.mxu0 %v50
    %1224 = vmatprep.subr.mxu0 0.0
    %1225 = vmatpush1.msra.mxu0 %v49
    %1226 = vmatprep.subr.mxu0 0.0
    %1227 = vmatpush2.msra.mxu0 0.0
    %1228 = vmatprep.subr.mxu0 0.0
    %1229 = vmatpush2.msra.mxu0 0.0
    %1230 = vmatprep.subr.mxu0 0.0
    %1231 = vmatpush2.msra.mxu0 0.0
    %1232 = vmatprep.subr.mxu0 0.0
    %1233 = vmatpush2.msra.mxu0 0.0
    %1234 = vmatprep.subr.mxu0 0.0
    %1235 = vmatpush2.msra.mxu0 0.0
    %1236 = vmatprep.subr.mxu0 0.0
    %1237 = vmatpush2.msra.mxu0 0.0
    %1238 = vmatprep.subr.mxu0 0.0
    %1239 = vmatpush2.msra.mxu0 0.0
    %1240 = vmatprep.subr.mxu0 0.0
    %1241 = vmatpush2.msra.mxu0 0.0
    %1242 = vmatprep.subr.mxu0 0.0
    %1243 = vmatpush2.msra.mxu0 0.0
    %1244 = vmatprep.subr.mxu0 0.0
    %1245 = vmatpush2.msra.mxu0 0.0
    %1246 = vmatprep.subr.mxu0 0.0
    %1247 = vmatpush2.msra.mxu0 0.0
    %1248 = vmatprep.subr.mxu0 0.0
    %1249 = vmatpush2.msra.mxu0 0.0
    %1250 = vmatprep.subr.mxu0 0.0
    %1251 = vmatpush2.msra.mxu0 0.0
    %1252 = vmatprep.subr.mxu0 0.0
    %1253 = vmatpush2.msra.mxu0 0.0
    %1254 = vmatprep.subr.mxu0 0.0
    %1255 = vmatpush2.msra.mxu0 0.0
    %1256 = vmatprep.subr.mxu0 0.0
    %1257 = vmatpush2.msra.mxu0 0.0
    %1258 = vmatprep.mubr.f32.mxu0 0.0
    %1259 = vmatmul.mubr.f32.gmra.mxu0 %v1111
    %v1260 = vpop.f32.mrf.mxu0
    %v1261 = vadd.f32 %v1186, %v1260
    %v1262 = vpop.f32.mrf.mxu0
    %1263 = vmatprep.mubr.f32.mxu0 0.0
    %1264 = vmatmul.mubr.f32.gmra.mxu0 %v1112
    %v1265 = vpop.f32.mrf.mxu0
    %v1266 = vadd.f32 %v1191, %v1265
    %v1267 = vpop.f32.mrf.mxu0
    %1268 = vdwg.mxu0
    %v1269 = vtanh.pop %v1261
    %v1270 = vtanh.pop %v1266
    %v1271 = vmul.f32 %v1269, %v170
    %v1272 = vmul.f32 %v1270, %v170
    %v1273 = vsel %vm174, %v1271, 0.0
    %1274 = vadd.xlane.f32.xlu0 %v1273
    %v1275 = vpop.xlane.xlu0 %1274
    %v1276 = vsel %vm174, %v1272, 0.0
    %1277 = vadd.xlane.f32.xlu0 %v1276
    %v1278 = vpop.xlane.xlu0 %1277
    %vm1279 = vcmp.eq.s32.totalorder %v76, 6
    %v1280 = vsel %vm1279, %v1275, 0.0
    %v1281 = vsel %vm1279, %v1278, 0.0
    %v1282 = vadd.f32 %v1099, %v1280
    %v1283 = vadd.f32 %v1100, %v1281
    %1284 = vset.pattern.permute.xlu0 7
    %1285 = vperm.xlu0 %1284, %v45
    %v1286 = vpop.permute.xlu0 %1285
    %1287 = vset.pattern.permute.xlu0 7
    %1288 = vperm.xlu0 %1287, %v46
    %v1289 = vpop.permute.xlu0 %1288
    %vm1290 = vcmp.eq.s32.totalorder %v1286, %v76
    %vm1291 = vcmp.eq.s32.totalorder %v1289, %v76
    %v1292 = vsel %vm1290, 1, 0
    %v1293 = vsel %vm1291, 1, 0
    %v1294 = vcvt.s32.f32 %v1292
    %v1295 = vcvt.s32.f32 %v1293
    %v1297 = vsel %vm174, %v1269, 0
    %v1300 = vsel %vm174, %v1270, 0
    %1302 = vmatprep.subr.mxu0 0.0
    %1303 = vmatpush1.msra.mxu0 0.0
    %1304 = vmatprep.subr.mxu0 0.0
    %1305 = vmatpush1.msra.mxu0 0.0
    %1306 = vmatprep.subr.mxu0 0.0
    %1307 = vmatpush1.msra.mxu0 0.0
    %1308 = vmatprep.subr.mxu0 0.0
    %1309 = vmatpush1.msra.mxu0 0.0
    %1310 = vmatprep.subr.mxu0 0.0
    %1311 = vmatpush1.msra.mxu0 0.0
    %1312 = vmatprep.subr.mxu0 0.0
    %1313 = vmatpush1.msra.mxu0 0.0
    %1314 = vmatprep.subr.mxu0 0.0
    %1315 = vmatpush1.msra.mxu0 0.0
    %1316 = vmatprep.subr.mxu0 0.0
    %1317 = vmatpush1.msra.mxu0 0.0
    %1318 = vmatprep.subr.mxu0 0.0
    %1319 = vmatpush1.msra.mxu0 0.0
    %1320 = vmatprep.subr.mxu0 0.0
    %1321 = vmatpush1.msra.mxu0 0.0
    %1322 = vmatprep.subr.mxu0 0.0
    %1323 = vmatpush1.msra.mxu0 0.0
    %1324 = vmatprep.subr.mxu0 0.0
    %1325 = vmatpush1.msra.mxu0 0.0
    %1326 = vmatprep.subr.mxu0 0.0
    %1327 = vmatpush1.msra.mxu0 %v68
    %1328 = vmatprep.subr.mxu0 0.0
    %1329 = vmatpush1.msra.mxu0 %v67
    %1330 = vmatprep.subr.mxu0 0.0
    %1331 = vmatpush1.msra.mxu0 %v66
    %1332 = vmatprep.subr.mxu0 0.0
    %1333 = vmatpush1.msra.mxu0 %v65
    %1334 = vmatprep.subr.mxu0 0.0
    %1335 = vmatpush2.msra.mxu0 0.0
    %1336 = vmatprep.subr.mxu0 0.0
    %1337 = vmatpush2.msra.mxu0 0.0
    %1338 = vmatprep.subr.mxu0 0.0
    %1339 = vmatpush2.msra.mxu0 0.0
    %1340 = vmatprep.subr.mxu0 0.0
    %1341 = vmatpush2.msra.mxu0 0.0
    %1342 = vmatprep.subr.mxu0 0.0
    %1343 = vmatpush2.msra.mxu0 0.0
    %1344 = vmatprep.subr.mxu0 0.0
    %1345 = vmatpush2.msra.mxu0 0.0
    %1346 = vmatprep.subr.mxu0 0.0
    %1347 = vmatpush2.msra.mxu0 0.0
    %1348 = vmatprep.subr.mxu0 0.0
    %1349 = vmatpush2.msra.mxu0 0.0
    %1350 = vmatprep.subr.mxu0 0.0
    %1351 = vmatpush2.msra.mxu0 0.0
    %1352 = vmatprep.subr.mxu0 0.0
    %1353 = vmatpush2.msra.mxu0 0.0
    %1354 = vmatprep.subr.mxu0 0.0
    %1355 = vmatpush2.msra.mxu0 0.0
    %1356 = vmatprep.subr.mxu0 0.0
    %1357 = vmatpush2.msra.mxu0 0.0
    %1358 = vmatprep.subr.mxu0 0.0
    %1359 = vmatpush2.msra.mxu0 0.0
    %1360 = vmatprep.subr.mxu0 0.0
    %1361 = vmatpush2.msra.mxu0 0.0
    %1362 = vmatprep.subr.mxu0 0.0
    %1363 = vmatpush2.msra.mxu0 0.0
    %1364 = vmatprep.subr.mxu0 0.0
    %1365 = vmatpush2.msra.mxu0 0.0
    %1366 = vmatprep.mubr.f32.mxu0 0.0
    %1367 = vmatmul.mubr.f32.gmra.mxu0 %v1297
    %v1368 = vpop.f32.mrf.mxu0
    %v1369 = vadd.f32 0.0, %v1368
    %v1370 = vpop.f32.mrf.mxu0
    %1371 = vmatprep.mubr.f32.mxu0 0.0
    %1372 = vmatmul.mubr.f32.gmra.mxu0 %v1300
    %v1373 = vpop.f32.mrf.mxu0
    %v1374 = vadd.f32 0.0, %v1373
    %v1375 = vpop.f32.mrf.mxu0
    %1376 = vdwg.mxu0
    %1377 = vmatprep.subr.mxu0 0.0
    %1378 = vmatpush1.msra.mxu0 %v64
    %1379 = vmatprep.subr.mxu0 0.0
    %1380 = vmatpush1.msra.mxu0 %v63
    %1381 = vmatprep.subr.mxu0 0.0
    %1382 = vmatpush1.msra.mxu0 %v62
    %1383 = vmatprep.subr.mxu0 0.0
    %1384 = vmatpush1.msra.mxu0 %v61
    %1385 = vmatprep.subr.mxu0 0.0
    %1386 = vmatpush1.msra.mxu0 %v60
    %1387 = vmatprep.subr.mxu0 0.0
    %1388 = vmatpush1.msra.mxu0 %v59
    %1389 = vmatprep.subr.mxu0 0.0
    %1390 = vmatpush1.msra.mxu0 %v58
    %1391 = vmatprep.subr.mxu0 0.0
    %1392 = vmatpush1.msra.mxu0 %v57
    %1393 = vmatprep.subr.mxu0 0.0
    %1394 = vmatpush1.msra.mxu0 %v56
    %1395 = vmatprep.subr.mxu0 0.0
    %1396 = vmatpush1.msra.mxu0 %v55
    %1397 = vmatprep.subr.mxu0 0.0
    %1398 = vmatpush1.msra.mxu0 %v54
    %1399 = vmatprep.subr.mxu0 0.0
    %1400 = vmatpush1.msra.mxu0 %v53
    %1401 = vmatprep.subr.mxu0 0.0
    %1402 = vmatpush1.msra.mxu0 %v52
    %1403 = vmatprep.subr.mxu0 0.0
    %1404 = vmatpush1.msra.mxu0 %v51
    %1405 = vmatprep.subr.mxu0 0.0
    %1406 = vmatpush1.msra.mxu0 %v50
    %1407 = vmatprep.subr.mxu0 0.0
    %1408 = vmatpush1.msra.mxu0 %v49
    %1409 = vmatprep.subr.mxu0 0.0
    %1410 = vmatpush2.msra.mxu0 0.0
    %1411 = vmatprep.subr.mxu0 0.0
    %1412 = vmatpush2.msra.mxu0 0.0
    %1413 = vmatprep.subr.mxu0 0.0
    %1414 = vmatpush2.msra.mxu0 0.0
    %1415 = vmatprep.subr.mxu0 0.0
    %1416 = vmatpush2.msra.mxu0 0.0
    %1417 = vmatprep.subr.mxu0 0.0
    %1418 = vmatpush2.msra.mxu0 0.0
    %1419 = vmatprep.subr.mxu0 0.0
    %1420 = vmatpush2.msra.mxu0 0.0
    %1421 = vmatprep.subr.mxu0 0.0
    %1422 = vmatpush2.msra.mxu0 0.0
    %1423 = vmatprep.subr.mxu0 0.0
    %1424 = vmatpush2.msra.mxu0 0.0
    %1425 = vmatprep.subr.mxu0 0.0
    %1426 = vmatpush2.msra.mxu0 0.0
    %1427 = vmatprep.subr.mxu0 0.0
    %1428 = vmatpush2.msra.mxu0 0.0
    %1429 = vmatprep.subr.mxu0 0.0
    %1430 = vmatpush2.msra.mxu0 0.0
    %1431 = vmatprep.subr.mxu0 0.0
    %1432 = vmatpush2.msra.mxu0 0.0
    %1433 = vmatprep.subr.mxu0 0.0
    %1434 = vmatpush2.msra.mxu0 0.0
    %1435 = vmatprep.subr.mxu0 0.0
    %1436 = vmatpush2.msra.mxu0 0.0
    %1437 = vmatprep.subr.mxu0 0.0
    %1438 = vmatpush2.msra.mxu0 0.0
    %1439 = vmatprep.subr.mxu0 0.0
    %1440 = vmatpush2.msra.mxu0 0.0
    %1441 = vmatprep.mubr.f32.mxu0 0.0
    %1442 = vmatmul.mubr.f32.gmra.mxu0 %v1294
    %v1443 = vpop.f32.mrf.mxu0
    %v1444 = vadd.f32 %v1369, %v1443
    %v1445 = vpop.f32.mrf.mxu0
    %1446 = vmatprep.mubr.f32.mxu0 0.0
    %1447 = vmatmul.mubr.f32.gmra.mxu0 %v1295
    %v1448 = vpop.f32.mrf.mxu0
    %v1449 = vadd.f32 %v1374, %v1448
    %v1450 = vpop.f32.mrf.mxu0
    %1451 = vdwg.mxu0
    %v1452 = vtanh.pop %v1444
    %v1453 = vtanh.pop %v1449
    %v1454 = vmul.f32 %v1452, %v170
    %v1455 = vmul.f32 %v1453, %v170
    %v1456 = vsel %vm174, %v1454, 0.0
    %1457 = vadd.xlane.f32.xlu0 %v1456
    %v1458 = vpop.xlane.xlu0 %1457
    %v1459 = vsel %vm174, %v1455, 0.0
    %1460 = vadd.xlane.f32.xlu0 %v1459
    %v1461 = vpop.xlane.xlu0 %1460
    %vm1462 = vcmp.eq.s32.totalorder %v76, 7
    %v1463 = vsel %vm1462, %v1458, 0.0
    %v1464 = vsel %vm1462, %v1461, 0.0
    %v1465 = vadd.f32 %v1282, %v1463
    %v1466 = vadd.f32 %v1283, %v1464
    %1467 = vset.pattern.permute.xlu0 0
    %1468 = vperm.xlu0 %1467, %v47
    %v1469 = vpop.permute.xlu0 %1468
    %1470 = vset.pattern.permute.xlu0 0
    %1471 = vperm.xlu0 %1470, %v48
    %v1472 = vpop.permute.xlu0 %1471
    %vm1473 = vcmp.lt.s32.totalorder %v76, %v1469
    %vm1474 = vcmp.lt.s32.totalorder %v76, %v1472
    %v1475 = vsel %vm1473, %v1465, -1e+30
    %v1476 = vsel %vm1474, %v1466, -1e+30
    %vm1477 = vcmask 64512
    %v1478 = vsel %vm1477, %v1475, -inf
    %1479 = vmax.xlane.f32.xlu0 %v1478
    %v1480 = vpop.xlane.xlu0 %1479
    %v1481 = vsel %vm1477, %v1476, -inf
    %1482 = vmax.xlane.f32.xlu0 %v1481
    %v1483 = vpop.xlane.xlu0 %1482
    %v1484 = vsub.f32 %v1475, %v1480
    %v1485 = vsub.f32 %v1476, %v1483
    %v1486 = vmul.f32 %v1484, 1.442695
    %v1487 = vpow.pop %v1486
    %v1488 = vmul.f32 %v1485, 1.442695
    %v1489 = vpow.pop %v1488
    %v1490 = vsel %vm1473, %v1487, 0.0
    %v1491 = vsel %vm1474, %v1489, 0.0
    %v1492 = vsel %vm1477, %v1490, 0.0
    %1493 = vadd.xlane.f32.xlu0 %v1492
    %v1494 = vpop.xlane.xlu0 %1493
    %v1495 = vsel %vm1477, %v1491, 0.0
    %1496 = vadd.xlane.f32.xlu0 %v1495
    %v1497 = vpop.xlane.xlu0 %1496
    %v1498 = vrcp.pop %v1494
    %v1499 = vrcp.pop %v1497
    %v1500 = vmul.f32 %v1490, %v1498
    %v1501 = vmul.f32 %v1491, %v1499
    %1503 = vset.pattern.permute.xlu0 0
    %1504 = vperm.xlu0 %1503, %v1500
    %v1505 = vpop.permute.xlu0 %1504
    %1508 = vset.pattern.permute.xlu0 0
    %1509 = vperm.xlu0 %1508, %v1501
    %v1510 = vpop.permute.xlu0 %1509
    %v1512 = vmul.f32 %v1505, %v164
    %v1513 = vmul.f32 %v1510, %v165
    %1514 = vset.pattern.permute.xlu0 1
    %1515 = vperm.xlu0 %1514, %v1500
    %v1516 = vpop.permute.xlu0 %1515
    %1518 = vset.pattern.permute.xlu0 1
    %1519 = vperm.xlu0 %1518, %v1501
    %v1520 = vpop.permute.xlu0 %1519
    %v1522 = vmul.f32 %v1516, %v354
    %v1523 = vmul.f32 %v1520, %v355
    %v1524 = vadd.f32 %v1512, %v1522
    %v1525 = vadd.f32 %v1513, %v1523
    %1526 = vset.pattern.permute.xlu0 2
    %1527 = vperm.xlu0 %1526, %v1500
    %v1528 = vpop.permute.xlu0 %1527
    %1530 = vset.pattern.permute.xlu0 2
    %1531 = vperm.xlu0 %1530, %v1501
    %v1532 = vpop.permute.xlu0 %1531
    %v1534 = vmul.f32 %v1528, %v537
    %v1535 = vmul.f32 %v1532, %v538
    %v1536 = vadd.f32 %v1524, %v1534
    %v1537 = vadd.f32 %v1525, %v1535
    %1538 = vset.pattern.permute.xlu0 3
    %1539 = vperm.xlu0 %1538, %v1500
    %v1540 = vpop.permute.xlu0 %1539
    %1542 = vset.pattern.permute.xlu0 3
    %1543 = vperm.xlu0 %1542, %v1501
    %v1544 = vpop.permute.xlu0 %1543
    %v1546 = vmul.f32 %v1540, %v720
    %v1547 = vmul.f32 %v1544, %v721
    %v1548 = vadd.f32 %v1536, %v1546
    %v1549 = vadd.f32 %v1537, %v1547
    %1550 = vset.pattern.permute.xlu0 4
    %1551 = vperm.xlu0 %1550, %v1500
    %v1552 = vpop.permute.xlu0 %1551
    %1554 = vset.pattern.permute.xlu0 4
    %1555 = vperm.xlu0 %1554, %v1501
    %v1556 = vpop.permute.xlu0 %1555
    %v1558 = vmul.f32 %v1552, %v903
    %v1559 = vmul.f32 %v1556, %v904
    %v1560 = vadd.f32 %v1548, %v1558
    %v1561 = vadd.f32 %v1549, %v1559
    %1562 = vset.pattern.permute.xlu0 5
    %1563 = vperm.xlu0 %1562, %v1500
    %v1564 = vpop.permute.xlu0 %1563
    %1566 = vset.pattern.permute.xlu0 5
    %1567 = vperm.xlu0 %1566, %v1501
    %v1568 = vpop.permute.xlu0 %1567
    %v1570 = vmul.f32 %v1564, %v1086
    %v1571 = vmul.f32 %v1568, %v1087
    %v1572 = vadd.f32 %v1560, %v1570
    %v1573 = vadd.f32 %v1561, %v1571
    %1574 = vset.pattern.permute.xlu0 6
    %1575 = vperm.xlu0 %1574, %v1500
    %v1576 = vpop.permute.xlu0 %1575
    %1578 = vset.pattern.permute.xlu0 6
    %1579 = vperm.xlu0 %1578, %v1501
    %v1580 = vpop.permute.xlu0 %1579
    %v1582 = vmul.f32 %v1576, %v1269
    %v1583 = vmul.f32 %v1580, %v1270
    %v1584 = vadd.f32 %v1572, %v1582
    %v1585 = vadd.f32 %v1573, %v1583
    %1586 = vset.pattern.permute.xlu0 7
    %1587 = vperm.xlu0 %1586, %v1500
    %v1588 = vpop.permute.xlu0 %1587
    %1590 = vset.pattern.permute.xlu0 7
    %1591 = vperm.xlu0 %1590, %v1501
    %v1592 = vpop.permute.xlu0 %1591
    %v1594 = vmul.f32 %v1588, %v1452
    %v1595 = vmul.f32 %v1592, %v1453
    %v1596 = vadd.f32 %v1584, %v1594
    %v1597 = vadd.f32 %v1585, %v1595
    %v1599 = vlaneseq
    %v1600 = vshrl.u32 %v1599, 7
    %v1601 = vsub.s32 0, %v1600
    %v1602 = vrot.slane %v74, %v1601
    %v1605 = vsel %vm174, %v1596, 0
    %v1608 = vsel %vm174, %v1597, 0
    %1610 = vmatprep.subr.mxu0 0.0
    %1611 = vmatpush1.msra.mxu0 0.0
    %1612 = vmatprep.subr.mxu0 0.0
    %1613 = vmatpush1.msra.mxu0 0.0
    %1614 = vmatprep.subr.mxu0 0.0
    %1615 = vmatpush1.msra.mxu0 0.0
    %1616 = vmatprep.subr.mxu0 0.0
    %1617 = vmatpush1.msra.mxu0 0.0
    %1618 = vmatprep.subr.mxu0 0.0
    %1619 = vmatpush1.msra.mxu0 0.0
    %1620 = vmatprep.subr.mxu0 0.0
    %1621 = vmatpush1.msra.mxu0 0.0
    %1622 = vmatprep.subr.mxu0 0.0
    %1623 = vmatpush1.msra.mxu0 0.0
    %1624 = vmatprep.subr.mxu0 0.0
    %1625 = vmatpush1.msra.mxu0 0.0
    %1626 = vmatprep.subr.mxu0 0.0
    %1627 = vmatpush1.msra.mxu0 0.0
    %1628 = vmatprep.subr.mxu0 0.0
    %1629 = vmatpush1.msra.mxu0 0.0
    %1630 = vmatprep.subr.mxu0 0.0
    %1631 = vmatpush1.msra.mxu0 0.0
    %1632 = vmatprep.subr.mxu0 0.0
    %1633 = vmatpush1.msra.mxu0 0.0
    %1634 = vmatprep.subr.mxu0 0.0
    %1635 = vmatpush1.msra.mxu0 %v73
    %1636 = vmatprep.subr.mxu0 0.0
    %1637 = vmatpush1.msra.mxu0 %v72
    %1638 = vmatprep.subr.mxu0 0.0
    %1639 = vmatpush1.msra.mxu0 %v71
    %1640 = vmatprep.subr.mxu0 0.0
    %1641 = vmatpush1.msra.mxu0 %v70
    %1642 = vmatprep.subr.mxu0 0.0
    %1643 = vmatpush2.msra.mxu0 0.0
    %1644 = vmatprep.subr.mxu0 0.0
    %1645 = vmatpush2.msra.mxu0 0.0
    %1646 = vmatprep.subr.mxu0 0.0
    %1647 = vmatpush2.msra.mxu0 0.0
    %1648 = vmatprep.subr.mxu0 0.0
    %1649 = vmatpush2.msra.mxu0 0.0
    %1650 = vmatprep.subr.mxu0 0.0
    %1651 = vmatpush2.msra.mxu0 0.0
    %1652 = vmatprep.subr.mxu0 0.0
    %1653 = vmatpush2.msra.mxu0 0.0
    %1654 = vmatprep.subr.mxu0 0.0
    %1655 = vmatpush2.msra.mxu0 0.0
    %1656 = vmatprep.subr.mxu0 0.0
    %1657 = vmatpush2.msra.mxu0 0.0
    %1658 = vmatprep.subr.mxu0 0.0
    %1659 = vmatpush2.msra.mxu0 0.0
    %1660 = vmatprep.subr.mxu0 0.0
    %1661 = vmatpush2.msra.mxu0 0.0
    %1662 = vmatprep.subr.mxu0 0.0
    %1663 = vmatpush2.msra.mxu0 0.0
    %1664 = vmatprep.subr.mxu0 0.0
    %1665 = vmatpush2.msra.mxu0 0.0
    %1666 = vmatprep.subr.mxu0 0.0
    %1667 = vmatpush2.msra.mxu0 0.0
    %1668 = vmatprep.subr.mxu0 0.0
    %1669 = vmatpush2.msra.mxu0 0.0
    %1670 = vmatprep.subr.mxu0 0.0
    %1671 = vmatpush2.msra.mxu0 0.0
    %1672 = vmatprep.subr.mxu0 0.0
    %1673 = vmatpush2.msra.mxu0 0.0
    %1674 = vmatprep.mubr.f32.mxu0 0.0
    %1675 = vmatmul.mubr.f32.gmra.mxu0 %v1605
    %v1676 = vpop.f32.mrf.mxu0
    %v1677 = vadd.f32 %v1602, %v1676
    %v1678 = vpop.f32.mrf.mxu0
    %1679 = vmatprep.mubr.f32.mxu0 0.0
    %1680 = vmatmul.mubr.f32.gmra.mxu0 %v1608
    %v1681 = vpop.f32.mrf.mxu0
    %v1682 = vadd.f32 %v1602, %v1681
    %v1683 = vpop.f32.mrf.mxu0
    %1684 = vdwg.mxu0
    %v1685 = vtanh.pop %v1677
    %v1686 = vtanh.pop %v1682
    %1687 = vst.msk [vmem:[#allocation5] sm:$0xff] %vm174, %v1685
    %1688 = vst.msk [vmem:[#allocation5 + $0x8] sm:$0xff] %vm174, %v1686
    %1689 = vst.msk [vmem:[%s14] sm:$0xff] %vm1477, %v1500
    %1690 = vst.msk [vmem:[%s14 + $0x8] sm:$0xff] %vm1477, %v1501
    %s1691 = sld [smem:[#allocation2]]
    %v1692 = vld [vmem:[%s8] sm:$0xf]
    %vm1693 = vcmask 130048
    %v1695 = vsel %vm1693, %v1692, 0
    %1697 = vmatprep.subr.mxu0 0.0
    %1698 = vmatpush1.msra.mxu0 0.0
    %1699 = vmatprep.subr.mxu0 0.0
    %1700 = vmatpush1.msra.mxu0 0.0
    %1701 = vmatprep.subr.mxu0 0.0
    %1702 = vmatpush1.msra.mxu0 0.0
    %1703 = vmatprep.subr.mxu0 0.0
    %1704 = vmatpush1.msra.mxu0 0.0
    %1705 = vmatprep.subr.mxu0 0.0
    %1706 = vmatpush1.msra.mxu0 0.0
    %1707 = vmatprep.subr.mxu0 0.0
    %1708 = vmatpush1.msra.mxu0 0.0
    %1709 = vmatprep.subr.mxu0 0.0
    %1710 = vmatpush1.msra.mxu0 0.0
    %1711 = vmatprep.subr.mxu0 0.0
    %1712 = vmatpush1.msra.mxu0 0.0
    %1713 = vmatprep.subr.mxu0 0.0
    %1714 = vmatpush1.msra.mxu0 0.0
    %1715 = vmatprep.subr.mxu0 0.0
    %1716 = vmatpush1.msra.mxu0 0.0
    %1717 = vmatprep.subr.mxu0 0.0
    %1718 = vmatpush1.msra.mxu0 0.0
    %1719 = vmatprep.subr.mxu0 0.0
    %1720 = vmatpush1.msra.mxu0 0.0
    %1721 = vmatprep.subr.mxu0 0.0
    %1722 = vmatpush1.msra.mxu0 0.0
    %1723 = vmatprep.subr.mxu0 0.0
    %1724 = vmatpush1.msra.mxu0 0.0
    %1725 = vmatprep.subr.mxu0 0.0
    %1726 = vmatpush1.msra.mxu0 %v1686
    %1727 = vmatprep.subr.mxu0 0.0
    %1728 = vmatpush1.msra.mxu0 %v1685
    %1729 = vmatprep.subr.mxu0 0.0
    %1730 = vmatpush2.msra.mxu0 0.0
    %1731 = vmatprep.subr.mxu0 0.0
    %1732 = vmatpush2.msra.mxu0 0.0
    %1733 = vmatprep.subr.mxu0 0.0
    %1734 = vmatpush2.msra.mxu0 0.0
    %1735 = vmatprep.subr.mxu0 0.0
    %1736 = vmatpush2.msra.mxu0 0.0
    %1737 = vmatprep.subr.mxu0 0.0
    %1738 = vmatpush2.msra.mxu0 0.0
    %1739 = vmatprep.subr.mxu0 0.0
    %1740 = vmatpush2.msra.mxu0 0.0
    %1741 = vmatprep.subr.mxu0 0.0
    %1742 = vmatpush2.msra.mxu0 0.0
    %1743 = vmatprep.subr.mxu0 0.0
    %1744 = vmatpush2.msra.mxu0 0.0
    %1745 = vmatprep.subr.mxu0 0.0
    %1746 = vmatpush2.msra.mxu0 0.0
    %1747 = vmatprep.subr.mxu0 0.0
    %1748 = vmatpush2.msra.mxu0 0.0
    %1749 = vmatprep.subr.mxu0 0.0
    %1750 = vmatpush2.msra.mxu0 0.0
    %1751 = vmatprep.subr.mxu0 0.0
    %1752 = vmatpush2.msra.mxu0 0.0
    %1753 = vmatprep.subr.mxu0 0.0
    %1754 = vmatpush2.msra.mxu0 0.0
    %1755 = vmatprep.subr.mxu0 0.0
    %1756 = vmatpush2.msra.mxu0 0.0
    %1757 = vmatprep.subr.mxu0 0.0
    %1758 = vmatpush2.msra.mxu0 0.0
    %1759 = vmatprep.subr.mxu0 0.0
    %1760 = vmatpush2.msra.mxu0 0.0
    %1761 = vmatprep.mubr.f32.mxu0 0.0
    %1762 = vmatmul.mubr.f32.gmra.mxu0 %v1695
    %v1763 = vpop.f32.mrf.mxu0
    %v1764 = vadd.f32 0.0, %v1763
    %v1765 = vpop.f32.mrf.mxu0
    %1766 = vdwg.mxu0
    %v1767 = vld [vmem:[%s10] sm:$0xf]
    %v1768 = vstv %s1691
    %v1769 = vmul.f32 %v1768, %v1767
    %s1770 = ssub.f32 1.0, %s1691
    %v1771 = vstv %s1770
    %v1772 = vmul.f32 %v1771, %v1764
    %v1773 = vadd.f32 %v1769, %v1772
    %vm1774 = vcmask 257024
    %1775 = vst.msk [vmem:[%s12] sm:$0xf] %vm1774, %v1773
    %v1776 = vld [vmem:[%s9] sm:$0xf]
    %v1778 = vsel %vm1693, %v1776, 0
    %1780 = vmatprep.subr.mxu0 0.0
    %1781 = vmatpush1.msra.mxu0 0.0
    %1782 = vmatprep.subr.mxu0 0.0
    %1783 = vmatpush1.msra.mxu0 0.0
    %1784 = vmatprep.subr.mxu0 0.0
    %1785 = vmatpush1.msra.mxu0 0.0
    %1786 = vmatprep.subr.mxu0 0.0
    %1787 = vmatpush1.msra.mxu0 0.0
    %1788 = vmatprep.subr.mxu0 0.0
    %1789 = vmatpush1.msra.mxu0 0.0
    %1790 = vmatprep.subr.mxu0 0.0
    %1791 = vmatpush1.msra.mxu0 0.0
    %1792 = vmatprep.subr.mxu0 0.0
    %1793 = vmatpush1.msra.mxu0 0.0
    %1794 = vmatprep.subr.mxu0 0.0
    %1795 = vmatpush1.msra.mxu0 0.0
    %1796 = vmatprep.subr.mxu0 0.0
    %1797 = vmatpush1.msra.mxu0 0.0
    %1798 = vmatprep.subr.mxu0 0.0
    %1799 = vmatpush1.msra.mxu0 0.0
    %1800 = vmatprep.subr.mxu0 0.0
    %1801 = vmatpush1.msra.mxu0 0.0
    %1802 = vmatprep.subr.mxu0 0.0
    %1803 = vmatpush1.msra.mxu0 0.0
    %1804 = vmatprep.subr.mxu0 0.0
    %1805 = vmatpush1.msra.mxu0 0.0
    %1806 = vmatprep.subr.mxu0 0.0
    %1807 = vmatpush1.msra.mxu0 0.0
    %1808 = vmatprep.subr.mxu0 0.0
    %1809 = vmatpush1.msra.mxu0 %v1686
    %1810 = vmatprep.subr.mxu0 0.0
    %1811 = vmatpush1.msra.mxu0 %v1685
    %1812 = vmatprep.subr.mxu0 0.0
    %1813 = vmatpush2.msra.mxu0 0.0
    %1814 = vmatprep.subr.mxu0 0.0
    %1815 = vmatpush2.msra.mxu0 0.0
    %1816 = vmatprep.subr.mxu0 0.0
    %1817 = vmatpush2.msra.mxu0 0.0
    %1818 = vmatprep.subr.mxu0 0.0
    %1819 = vmatpush2.msra.mxu0 0.0
    %1820 = vmatprep.subr.mxu0 0.0
    %1821 = vmatpush2.msra.mxu0 0.0
    %1822 = vmatprep.subr.mxu0 0.0
    %1823 = vmatpush2.msra.mxu0 0.0
    %1824 = vmatprep.subr.mxu0 0.0
    %1825 = vmatpush2.msra.mxu0 0.0
    %1826 = vmatprep.subr.mxu0 0.0
    %1827 = vmatpush2.msra.mxu0 0.0
    %1828 = vmatprep.subr.mxu0 0.0
    %1829 = vmatpush2.msra.mxu0 0.0
    %1830 = vmatprep.subr.mxu0 0.0
    %1831 = vmatpush2.msra.mxu0 0.0
    %1832 = vmatprep.subr.mxu0 0.0
    %1833 = vmatpush2.msra.mxu0 0.0
    %1834 = vmatprep.subr.mxu0 0.0
    %1835 = vmatpush2.msra.mxu0 0.0
    %1836 = vmatprep.subr.mxu0 0.0
    %1837 = vmatpush2.msra.mxu0 0.0
    %1838 = vmatprep.subr.mxu0 0.0
    %1839 = vmatpush2.msra.mxu0 0.0
    %1840 = vmatprep.subr.mxu0 0.0
    %1841 = vmatpush2.msra.mxu0 0.0
    %1842 = vmatprep.subr.mxu0 0.0
    %1843 = vmatpush2.msra.mxu0 0.0
    %1844 = vmatprep.mubr.f32.mxu0 0.0
    %1845 = vmatmul.mubr.f32.gmra.mxu0 %v1778
    %v1846 = vpop.f32.mrf.mxu0
    %v1847 = vadd.f32 0.0, %v1846
    %v1848 = vpop.f32.mrf.mxu0
    %1849 = vdwg.mxu0
    %v1851 = vsel %vm174, %v1847, 0
    %v1854 = vsel %vm174, %v1773, 0
    %1856 = vmatprep.subr.mxu0 0.0
    %1857 = vmatpush1.xpose.msra.mxu0 0.0
    %1858 = vmatprep.subr.mxu0 0.0
    %1859 = vmatpush1.xpose.msra.mxu0 0.0
    %1860 = vmatprep.subr.mxu0 0.0
    %1861 = vmatpush1.xpose.msra.mxu0 0.0
    %1862 = vmatprep.subr.mxu0 0.0
    %1863 = vmatpush1.xpose.msra.mxu0 0.0
    %1864 = vmatprep.subr.mxu0 0.0
    %1865 = vmatpush1.xpose.msra.mxu0 0.0
    %1866 = vmatprep.subr.mxu0 0.0
    %1867 = vmatpush1.xpose.msra.mxu0 0.0
    %1868 = vmatprep.subr.mxu0 0.0
    %1869 = vmatpush1.xpose.msra.mxu0 0.0
    %1870 = vmatprep.subr.mxu0 0.0
    %1871 = vmatpush1.xpose.msra.mxu0 0.0
    %1872 = vmatprep.subr.mxu0 0.0
    %1873 = vmatpush1.xpose.msra.mxu0 0.0
    %1874 = vmatprep.subr.mxu0 0.0
    %1875 = vmatpush1.xpose.msra.mxu0 0.0
    %1876 = vmatprep.subr.mxu0 0.0
    %1877 = vmatpush1.xpose.msra.mxu0 0.0
    %1878 = vmatprep.subr.mxu0 0.0
    %1879 = vmatpush1.xpose.msra.mxu0 0.0
    %1880 = vmatprep.subr.mxu0 0.0
    %1881 = vmatpush1.xpose.msra.mxu0 0.0
    %1882 = vmatprep.subr.mxu0 0.0
    %1883 = vmatpush1.xpose.msra.mxu0 0.0
    %1884 = vmatprep.subr.mxu0 0.0
    %1885 = vmatpush1.xpose.msra.mxu0 0.0
    %1886 = vmatprep.subr.mxu0 0.0
    %1887 = vmatpush1.xpose.msra.mxu0 %v1854
    %1888 = vmatprep.subr.mxu0 0.0
    %1889 = vmatpush2.xpose.msra.mxu0 0.0
    %1890 = vmatprep.subr.mxu0 0.0
    %1891 = vmatpush2.xpose.msra.mxu0 0.0
    %1892 = vmatprep.subr.mxu0 0.0
    %1893 = vmatpush2.xpose.msra.mxu0 0.0
    %1894 = vmatprep.subr.mxu0 0.0
    %1895 = vmatpush2.xpose.msra.mxu0 0.0
    %1896 = vmatprep.subr.mxu0 0.0
    %1897 = vmatpush2.xpose.msra.mxu0 0.0
    %1898 = vmatprep.subr.mxu0 0.0
    %1899 = vmatpush2.xpose.msra.mxu0 0.0
    %1900 = vmatprep.subr.mxu0 0.0
    %1901 = vmatpush2.xpose.msra.mxu0 0.0
    %1902 = vmatprep.subr.mxu0 0.0
    %1903 = vmatpush2.xpose.msra.mxu0 0.0
    %1904 = vmatprep.subr.mxu0 0.0
    %1905 = vmatpush2.xpose.msra.mxu0 0.0
    %1906 = vmatprep.subr.mxu0 0.0
    %1907 = vmatpush2.xpose.msra.mxu0 0.0
    %1908 = vmatprep.subr.mxu0 0.0
    %1909 = vmatpush2.xpose.msra.mxu0 0.0
    %1910 = vmatprep.subr.mxu0 0.0
    %1911 = vmatpush2.xpose.msra.mxu0 0.0
    %1912 = vmatprep.subr.mxu0 0.0
    %1913 = vmatpush2.xpose.msra.mxu0 0.0
    %1914 = vmatprep.subr.mxu0 0.0
    %1915 = vmatpush2.xpose.msra.mxu0 0.0
    %1916 = vmatprep.subr.mxu0 0.0
    %1917 = vmatpush2.xpose.msra.mxu0 0.0
    %1918 = vmatprep.subr.mxu0 0.0
    %1919 = vmatpush2.xpose.msra.mxu0 0.0
    %1920 = vmatprep.mubr.f32.mxu0 0.0
    %1921 = vmatmul.mubr.f32.gmra.mxu0 %v1851
    %v1922 = vpop.f32.mrf.mxu0
    %v1923 = vadd.f32 0.0, %v1922
    %v1924 = vpop.f32.mrf.mxu0
    %1925 = vdwg.mxu0
    %v1926 = vmul.f32 %v1847, %v1847
    %v1927 = vsel %vm1774, %v1926, 0.0
    %1928 = vadd.xlane.f32.xlu0 %v1927
    %v1929 = vpop.xlane.xlu0 %1928
    %v1930 = vmul.f32 %v1773, %v1773
    %v1932 = vsel %vm174, 1.0, 0
    %v1935 = vsel %vm174, %v1930, 0
    %1937 = vmatprep.subr.mxu0 0.0
    %1938 = vmatpush1.xpose.msra.mxu0 0.0
    %1939 = vmatprep.subr.mxu0 0.0
    %1940 = vmatpush1.xpose.msra.mxu0 0.0
    %1941 = vmatprep.subr.mxu0 0.0
    %1942 = vmatpush1.xpose.msra.mxu0 0.0
    %1943 = vmatprep.subr.mxu0 0.0
    %1944 = vmatpush1.xpose.msra.mxu0 0.0
    %1945 = vmatprep.subr.mxu0 0.0
    %1946 = vmatpush1.xpose.msra.mxu0 0.0
    %1947 = vmatprep.subr.mxu0 0.0
    %1948 = vmatpush1.xpose.msra.mxu0 0.0
    %1949 = vmatprep.subr.mxu0 0.0
    %1950 = vmatpush1.xpose.msra.mxu0 0.0
    %1951 = vmatprep.subr.mxu0 0.0
    %1952 = vmatpush1.xpose.msra.mxu0 0.0
    %1953 = vmatprep.subr.mxu0 0.0
    %1954 = vmatpush1.xpose.msra.mxu0 0.0
    %1955 = vmatprep.subr.mxu0 0.0
    %1956 = vmatpush1.xpose.msra.mxu0 0.0
    %1957 = vmatprep.subr.mxu0 0.0
    %1958 = vmatpush1.xpose.msra.mxu0 0.0
    %1959 = vmatprep.subr.mxu0 0.0
    %1960 = vmatpush1.xpose.msra.mxu0 0.0
    %1961 = vmatprep.subr.mxu0 0.0
    %1962 = vmatpush1.xpose.msra.mxu0 0.0
    %1963 = vmatprep.subr.mxu0 0.0
    %1964 = vmatpush1.xpose.msra.mxu0 0.0
    %1965 = vmatprep.subr.mxu0 0.0
    %1966 = vmatpush1.xpose.msra.mxu0 0.0
    %1967 = vmatprep.subr.mxu0 0.0
    %1968 = vmatpush1.xpose.msra.mxu0 %v1935
    %1969 = vmatprep.subr.mxu0 0.0
    %1970 = vmatpush2.xpose.msra.mxu0 0.0
    %1971 = vmatprep.subr.mxu0 0.0
    %1972 = vmatpush2.xpose.msra.mxu0 0.0
    %1973 = vmatprep.subr.mxu0 0.0
    %1974 = vmatpush2.xpose.msra.mxu0 0.0
    %1975 = vmatprep.subr.mxu0 0.0
    %1976 = vmatpush2.xpose.msra.mxu0 0.0
    %1977 = vmatprep.subr.mxu0 0.0
    %1978 = vmatpush2.xpose.msra.mxu0 0.0
    %1979 = vmatprep.subr.mxu0 0.0
    %1980 = vmatpush2.xpose.msra.mxu0 0.0
    %1981 = vmatprep.subr.mxu0 0.0
    %1982 = vmatpush2.xpose.msra.mxu0 0.0
    %1983 = vmatprep.subr.mxu0 0.0
    %1984 = vmatpush2.xpose.msra.mxu0 0.0
    %1985 = vmatprep.subr.mxu0 0.0
    %1986 = vmatpush2.xpose.msra.mxu0 0.0
    %1987 = vmatprep.subr.mxu0 0.0
    %1988 = vmatpush2.xpose.msra.mxu0 0.0
    %1989 = vmatprep.subr.mxu0 0.0
    %1990 = vmatpush2.xpose.msra.mxu0 0.0
    %1991 = vmatprep.subr.mxu0 0.0
    %1992 = vmatpush2.xpose.msra.mxu0 0.0
    %1993 = vmatprep.subr.mxu0 0.0
    %1994 = vmatpush2.xpose.msra.mxu0 0.0
    %1995 = vmatprep.subr.mxu0 0.0
    %1996 = vmatpush2.xpose.msra.mxu0 0.0
    %1997 = vmatprep.subr.mxu0 0.0
    %1998 = vmatpush2.xpose.msra.mxu0 0.0
    %1999 = vmatprep.subr.mxu0 0.0
    %2000 = vmatpush2.xpose.msra.mxu0 0.0
    %2001 = vmatprep.mubr.f32.mxu0 0.0
    %2002 = vmatmul.mubr.f32.gmra.mxu0 %v1932
    %v2003 = vpop.f32.mrf.mxu0
    %v2004 = vadd.f32 0.0, %v2003
    %v2005 = vpop.f32.mrf.mxu0
    %2006 = vdwg.mxu0
    %v2007 = vmul.f32 %v1923, 2.0
    %v2008 = vsub.f32 %v2007, %v1929
    %v2009 = vlaneseq
    %v2010 = vshrl.u32 %v2009, 7
    %v2011 = vsub.s32 0, %v2010
    %v2012 = vrot.slane %v2004, %v2011
    %v2013 = vsub.f32 %v2008, %v2012
    %vm2014 = vcmask 27648
    %v2015 = vsel %vm2014, %v2013, -inf
    %2016 = vmax.xlane.f32.xlu0 %v2015
    %v2017 = vpop.xlane.xlu0 %2016
    %v2018 = vsub.f32 %v2013, %v2017
    %v2019 = vmul.f32 %v2018, 1.442695
    %v2020 = vpow.pop %v2019
    %v2021 = vsel %vm2014, %v2020, 0.0
    %2022 = vadd.xlane.f32.xlu0 %v2021
    %v2023 = vpop.xlane.xlu0 %2022
    %v2024 = vrcp.pop %v2023
    %v2025 = vmul.f32 %v2020, %v2024
    %2026 = vst.msk [vmem:[#allocation3] sm:$0xf] %vm2014, %v2025
    // Predicated region
    $region46: #{tpu_custom_call.1} parent=1 // pred_check
      _
    $region47: #{tpu_custom_call.1} parent=1 // pred_check_branch
      %2028 = sbr.rel (0) target = $region49
    $region48: #{tpu_custom_call.1} parent=1 // pred_region
      %s2030 = ssub.s32 64, 64
      %2031 = vsyncadd [#allocation4], %s2030
      %s2033 = sshll.u32 [#allocation3], 4
      %s2034 = int_to_ptr.vmem [resolvable:$true] %s2033
      %2036 = dma.vmem_to_hbm [thread:$0]  %s2034, 64, %s11, [#allocation4]
    $region49: #{tpu_custom_call.1} parent=1 // pred_fallthru
      _
    // Predicated region
    $region50: #{tpu_custom_call.1} parent=1 // pred_check
      _
    $region51: #{tpu_custom_call.1} parent=1 // pred_check_branch
      %2038 = sbr.rel (0) target = $region53
    $region52: #{tpu_custom_call.1} parent=1 // pred_region
      _
    $region53: #{tpu_custom_call.1} parent=1 // pred_fallthru
      _
    // Predicated region
    $region54: #{tpu_custom_call.1} parent=1 // pred_check
      _
    $region55: #{tpu_custom_call.1} parent=1 // pred_check_branch
      %2040 = sbr.rel (0) target = $region57
    $region56: #{tpu_custom_call.1} parent=1 // pred_region
      %s2042 = ssub.s32 256, 256
      %2043 = vsyncadd [#allocation6], %s2042
      %s2044 = sshll.u32 [#allocation5], 4
      %s2045 = int_to_ptr.vmem [resolvable:$true] %s2044
      %2050 = dma.vmem_to_hbm [thread:$0]  %s2045, 256, %s13, [#allocation6], 128, 128, 8
    $region57: #{tpu_custom_call.1} parent=1 // pred_fallthru
      _
    // Predicated region
    $region58: #{tpu_custom_call.1} parent=1 // pred_check
      _
    $region59: #{tpu_custom_call.1} parent=1 // pred_check_branch
      %2052 = sbr.rel (0) target = $region61
    $region60: #{tpu_custom_call.1} parent=1 // pred_region
      _
    $region61: #{tpu_custom_call.1} parent=1 // pred_fallthru
      _
    // Predicated region
    $region62: #{tpu_custom_call.1} parent=1 // pred_check
      _
    $region63: #{tpu_custom_call.1} parent=1 // pred_check_branch
      %2054 = sbr.rel (0) target = $region65
    $region64: #{tpu_custom_call.1} parent=1 // pred_region
      %2055 = dma.done [#allocation4], 64
    $region65: #{tpu_custom_call.1} parent=1 // pred_fallthru
      _
    // Predicated region
    $region66: #{tpu_custom_call.1} parent=1 // pred_check
      _
    $region67: #{tpu_custom_call.1} parent=1 // pred_check_branch
      %2057 = sbr.rel (0) target = $region69
    $region68: #{tpu_custom_call.1} parent=1 // pred_region
      _
    $region69: #{tpu_custom_call.1} parent=1 // pred_fallthru
      _
    // Predicated region
    $region70: #{tpu_custom_call.1} parent=1 // pred_check
      _
    $region71: #{tpu_custom_call.1} parent=1 // pred_check_branch
      %2059 = sbr.rel (0) target = $region73
    $region72: #{tpu_custom_call.1} parent=1 // pred_region
      %2060 = dma.done [#allocation6], 256
    $region73: #{tpu_custom_call.1} parent=1 // pred_fallthru
      _
    // Predicated region
    $region74: #{tpu_custom_call.1} parent=1 // pred_check
      _
    $region75: #{tpu_custom_call.1} parent=1 // pred_check_branch
      %2062 = sbr.rel (0) target = $region77
    $region76: #{tpu_custom_call.1} parent=1 // pred_region
      _
    $region77: #{tpu_custom_call.1} parent=1 // pred_fallthru
      _
    %2063 = vsyncpa [#allocation4], 1
    %2064 = vsyncpa [#allocation6], 1

</llo_original>
